<compile_context>
chip_gen: v7x
topology: tpu7x:2x2x1
jax: 0.10.0
libtpu: 0.0.40
codegen_flags: <defaults>
</compile_context>

<pallas_src>
import math
import functools

import jax
import jax.numpy as jnp
from jax import lax
from jax.experimental import pallas as pl
from jax.experimental.pallas import tpu as pltpu


def _sb_attention_kernel(x_ref, wqkv_ref, bqkv_ref, mask_ref, ctx_ref, *rest,
                         num_heads, head_size, q_tile, with_scores):
    """Fused QKV projection + multi-head attention for one (batch, query-tile) step.

    x_ref:     [1, W, C]        hidden states (tokens x channels), compute dtype
    wqkv_ref:  [C, 3C]          fused projection weights (Q pre-scaled by 1/sqrt(D))
    bqkv_ref:  [1, 3C]          fused bias (f32; Q part pre-scaled)
    mask_ref:  [1, 1, W]        additive attention mask (broadcast over heads & queries)
    ctx_ref:   [1, H, D, tq]    transposed (lane-dense) context output
    score_ref: [1, H, tq, W]    raw (scaled+masked, pre-softmax) scores — scores variant only
    q_s/k_s/v_s: VMEM scratch [H, W, D]; persist across query tiles of one batch element
    """
    if with_scores:
        score_ref, q_s, k_s, v_s = rest
    else:
        score_ref = None
        q_s, k_s, v_s = rest

    C = num_heads * head_size
    qi = pl.program_id(1)

    # ---- Fused QKV projection, once per batch element (query-tile 0). ----------------
    @pl.when(qi == 0)
    def _project_qkv():
        x = x_ref[0]                                                      # [W, C]
        qkv = jnp.dot(x, wqkv_ref[...], preferred_element_type=jnp.float32)
        qkv = (qkv + bqkv_ref[...]).astype(q_s.dtype)                     # [W, 3C]
        W_ = qkv.shape[0]
        # One layout-aware relayout per slab (instead of 3*H sub-128-lane slices).
        q_s[...] = jnp.transpose(
            qkv[:, 0 * C:1 * C].reshape(W_, num_heads, head_size), (1, 0, 2))
        k_s[...] = jnp.transpose(
            qkv[:, 1 * C:2 * C].reshape(W_, num_heads, head_size), (1, 0, 2))
        v_s[...] = jnp.transpose(
            qkv[:, 2 * C:3 * C].reshape(W_, num_heads, head_size), (1, 0, 2))

    # ---- Head-batched attention for this query tile. ----------------------------------
    q_start = pl.multiple_of(qi * q_tile, q_tile)
    q_t = q_s[:, pl.ds(q_start, q_tile), :]                               # [H, tq, D]
    k_all = k_s[...]                                                      # [H, W, D]
    v_all = v_s[...]                                                      # [H, W, D]

    # Q already carries the 1/sqrt(D) scale (folded into the weights in the wrapper).
    # QK^T: contract D, batch over heads -> [H, tq, W].
    s = lax.dot_general(q_t, k_all,
                        dimension_numbers=(((2,), (2,)), ((0,), (0,))),
                        preferred_element_type=jnp.float32)
    s = s + mask_ref[...]                                                 # broadcast [1,1,W]

    if with_scores:
        score_ref[0] = s.astype(score_ref.dtype)

    # Numerically stable softmax over keys; normalization deferred past the PV matmul
    # so the reciprocal multiply touches [H, D, tq] instead of the W-wide scores.
    m = jnp.max(s, axis=-1, keepdims=True)
    p = jnp.exp(s - m)                                                    # [H, tq, W]
    denom = jnp.sum(p, axis=-1)                                           # [H, tq]

    # V^T @ P^T: contract over keys, output [H, D, tq] -> lane-dense ctx stores.
    ctx = lax.dot_general(v_all, p.astype(v_all.dtype),
                          dimension_numbers=(((1,), (2,)), ((0,), (0,))),
                          preferred_element_type=jnp.float32)             # [H, D, tq]
    ctx = ctx * pl.reciprocal(denom[:, None, :], approx=True)
    ctx_ref[0] = ctx.astype(ctx_ref.dtype)


def _vmem_limit_bytes():
    """Generation-aware VMEM request (never the full physical capacity)."""
    cap = None
    try:
        cap = int(pltpu.get_tpu_info().vmem_capacity_bytes)
    except Exception:
        cap = None
    if cap is None:
        try:
            kind = jax.devices()[0].device_kind.lower()
        except Exception:
            kind = ""
        cap = 64 * 1024 * 1024 if "v7" in kind else 128 * 1024 * 1024
    # Leave headroom for compiler-internal scratch / pipeline double buffers.
    return min(cap - 8 * 1024 * 1024, 100 * 1024 * 1024)


def _default_q_tile(W):
    if W <= 256 or W % 128 != 0:
        return W
    try:
        kind = jax.devices()[0].device_kind.lower()
    except Exception:
        kind = ""
    # v6e/v7x have a 256-wide MXU M dimension; v5e matches 128-wide tiles.
    if "v5" not in kind and W % 256 == 0:
        return 256
    return 128


def squeezebert_self_attention(hidden_states, attention_mask, params, num_heads,
                               output_attentions=False, *, q_tile=None,
                               compute_dtype=jnp.bfloat16, score_dtype=None):
    """hidden_states: [N, C, W] (PyTorch NCW layout); attention_mask: [N, W] additive."""
    N, C, W = hidden_states.shape
    assert C % num_heads == 0
    D = C // num_heads

    if q_tile is None:
        q_tile = _default_q_tile(W)
    assert W % q_tile == 0
    nq = W // q_tile

    if score_dtype is None:
        score_dtype = hidden_states.dtype
    out_dtype = hidden_states.dtype

    scale = 1.0 / math.sqrt(D)

    # Wrapper glue: NCW -> NWC, mask to [N, 1, W].
    x = jnp.transpose(hidden_states, (0, 2, 1)).astype(compute_dtype)     # [N, W, C]
    mask = attention_mask.reshape(N, 1, W).astype(jnp.float32)

    # Conv1d(k=1) weights are [cout, cin, 1]; present as [cin, cout], fuse Q|K|V and
    # fold the 1/sqrt(D) score scale into the Q projection.
    wq = jnp.transpose(params["wq"][:, :, 0], (1, 0)) * scale
    wk = jnp.transpose(params["wk"][:, :, 0], (1, 0))
    wv = jnp.transpose(params["wv"][:, :, 0], (1, 0))
    wqkv = jnp.concatenate([wq, wk, wv], axis=1).astype(compute_dtype)    # [C, 3C]
    bqkv = jnp.concatenate([params["bq"] * scale, params["bk"], params["bv"]]
                           ).reshape(1, 3 * C).astype(jnp.float32)        # [1, 3C]

    kernel = functools.partial(_sb_attention_kernel, num_heads=num_heads,
                               head_size=D, q_tile=q_tile,
                               with_scores=output_attentions)

    # Transposed (lane-dense) context output: [N, H, D, W]; reshape to [N, C, W] for free.
    ctx_shape = jax.ShapeDtypeStruct((N, num_heads, D, W), out_dtype)
    ctx_spec = pl.BlockSpec((1, num_heads, D, q_tile), lambda n, qi: (n, 0, 0, qi))
    if output_attentions:
        out_shape = (ctx_shape, jax.ShapeDtypeStruct((N, num_heads, W, W), score_dtype))
        out_specs = (ctx_spec,
                     pl.BlockSpec((1, num_heads, q_tile, W), lambda n, qi: (n, 0, qi, 0)))
    else:
        out_shape = ctx_shape
        out_specs = ctx_spec

    outs = pl.pallas_call(
        kernel,
        out_shape=out_shape,
        grid=(N, nq),
        in_specs=[
            # x: full sequence, constant in qi (default double-buffer prefetches next n).
            pl.BlockSpec((1, W, C), lambda n, qi: (n, 0, 0)),
            # Fused weights/bias are constant over the whole grid: single-buffer them.
            pl.BlockSpec((C, 3 * C), lambda n, qi: (0, 0),
                         pipeline_mode=pl.Buffered(1)),
            pl.BlockSpec((1, 3 * C), lambda n, qi: (0, 0),
                         pipeline_mode=pl.Buffered(1)),
            pl.BlockSpec((1, 1, W), lambda n, qi: (n, 0, 0)),              # additive mask
        ],
        out_specs=out_specs,
        scratch_shapes=[
            pltpu.VMEM((num_heads, W, D), compute_dtype),                  # Q (head-major)
            pltpu.VMEM((num_heads, W, D), compute_dtype),                  # K
            pltpu.VMEM((num_heads, W, D), compute_dtype),                  # V
        ],
        compiler_params=pltpu.CompilerParams(
            # qi axis must stay "arbitrary": the QKV scratch is reused across query tiles.
            dimension_semantics=("parallel", "arbitrary"),
            vmem_limit_bytes=_vmem_limit_bytes(),
        ),
    )(x, wqkv, bqkv, mask)

    if output_attentions:
        ctx_heads, scores = outs
    else:
        ctx_heads = outs

    # [N, H, D, W] is already the PyTorch transpose_output layout -> plain reshape.
    context_layer = ctx_heads.reshape(N, C, W)
    result = {"context_layer": context_layer}
    if output_attentions:
        result["attention_score"] = scores
    return result


def _reference(hidden_states, attention_mask, params, num_heads):
    """Pure-JAX mirror of the PyTorch forward for validation."""
    N, C, W = hidden_states.shape
    D = C // num_heads
    wq = params["wq"][:, :, 0]; wk = params["wk"][:, :, 0]; wv = params["wv"][:, :, 0]
    q = jnp.einsum("oc,ncw->now", wq, hidden_states) + params["bq"][None, :, None]
    k = jnp.einsum("oc,ncw->now", wk, hidden_states) + params["bk"][None, :, None]
    v = jnp.einsum("oc,ncw->now", wv, hidden_states) + params["bv"][None, :, None]
    qh = q.reshape(N, num_heads, D, W).transpose(0, 1, 3, 2)
    kh = k.reshape(N, num_heads, D, W)
    vh = v.reshape(N, num_heads, D, W).transpose(0, 1, 3, 2)
    scores = jnp.einsum("nhwd,nhdk->nhwk", qh, kh) / math.sqrt(D)
    scores = scores + attention_mask[:, None, None, :]
    probs = jax.nn.softmax(scores, axis=-1)
    ctx = jnp.einsum("nhwk,nhkd->nhwd", probs, vh)
    ctx = ctx.transpose(0, 1, 3, 2).reshape(N, C, W)
    return ctx, scores


if __name__ == "__main__":
    # Small SqueezeBERT-style config: cin=32, 4 heads (head size 8), seq len 8, batch 2.
    N, C, W, H = 2, 32, 8, 4

    key = jax.random.PRNGKey(0)
    k_x, k_wq, k_bq, k_wk, k_bk, k_wv, k_bv = jax.random.split(key, 7)

    hidden_states = jax.random.normal(k_x, (N, C, W), dtype=jnp.float32)
    params = {
        "wq": jax.random.normal(k_wq, (C, C, 1), dtype=jnp.float32) * 0.05,
        "bq": jax.random.normal(k_bq, (C,), dtype=jnp.float32) * 0.05,
        "wk": jax.random.normal(k_wk, (C, C, 1), dtype=jnp.float32) * 0.05,
        "bk": jax.random.normal(k_bk, (C,), dtype=jnp.float32) * 0.05,
        "wv": jax.random.normal(k_wv, (C, C, 1), dtype=jnp.float32) * 0.05,
        "bv": jax.random.normal(k_bv, (C,), dtype=jnp.float32) * 0.05,
    }
    # Additive attention mask [N, W]: 0 for valid tokens, -10000 for padding.
    lengths = jnp.array([W, 5])
    attention_mask = jnp.where(jnp.arange(W)[None, :] < lengths[:, None], 0.0, -10000.0)

    ref_ctx, ref_scores = _reference(hidden_states, attention_mask, params, H)

    # 1) f32 compute path, scores requested (checks both outputs tightly).
    out = squeezebert_self_attention(hidden_states, attention_mask, params, H,
                                     output_attentions=True,
                                     compute_dtype=jnp.float32)
    ctx = jax.block_until_ready(out["context_layer"])
    scores = jax.block_until_ready(out["attention_score"])
    assert ctx.shape == (N, C, W)
    assert scores.shape == (N, H, W, W)
    assert jnp.allclose(scores, ref_scores, atol=5e-3, rtol=5e-3)
    assert jnp.allclose(ctx, ref_ctx, atol=5e-3, rtol=5e-3)

    # 2) Default (bf16-matmul / f32-accumulate) perf path, no attentions (score output elided).
    out_bf16 = squeezebert_self_attention(hidden_states, attention_mask, params, H,
                                          output_attentions=False)
    ctx_bf16 = jax.block_until_ready(out_bf16["context_layer"])
    assert ctx_bf16.shape == (N, C, W)
    assert "attention_score" not in out_bf16
    assert jnp.allclose(ctx_bf16, ref_ctx, atol=5e-2, rtol=5e-2)

    print("KERNEL_OK")
</pallas_src>

<mosaic_0001>
module attributes {stable_mosaic.version = 11 : i64} {
  func.func @_sb_attention_kernel(%arg0: i32, %arg1: i32, %arg2: memref<1x8x32xf32, #tpu.memory_space<vmem>>, %arg3: memref<32x96xf32, #tpu.memory_space<vmem>>, %arg4: memref<1x96xf32, #tpu.memory_space<vmem>>, %arg5: memref<1x1x8xf32, #tpu.memory_space<vmem>>, %arg6: memref<1x4x8x8xf32, #tpu.memory_space<vmem>>, %arg7: memref<1x4x8x8xf32, #tpu.memory_space<vmem>>, %arg8: memref<4x8x8xf32, #tpu.memory_space<vmem>>, %arg9: memref<4x8x8xf32, #tpu.memory_space<vmem>>, %arg10: memref<4x8x8xf32, #tpu.memory_space<vmem>>) attributes {dimension_semantics = [#tpu.dimension_semantics<parallel>, #tpu.dimension_semantics<arbitrary>], iteration_bounds = array<i64: 2, 1>, scalar_prefetch = 0 : i64, scratch_operands = 3 : i64, tpu.core_type = #tpu.core_type<tc>, window_params = [{transform_indices = @transform_0, window_bounds = array<i64: 1, 8, 32>}, {pipeline_mode = #tpu.pipeline_mode<synchronous>, transform_indices = @transform_1, window_bounds = array<i64: 32, 96>}, {pipeline_mode = #tpu.pipeline_mode<synchronous>, transform_indices = @transform_2, window_bounds = array<i64: 1, 96>}, {transform_indices = @transform_3, window_bounds = array<i64: 1, 1, 8>}, {transform_indices = @transform_4, window_bounds = array<i64: 1, 4, 8, 8>}, {transform_indices = @transform_5, window_bounds = array<i64: 1, 4, 8, 8>}]} {
    %c0_i32 = arith.constant 0 : i32
    %0 = arith.cmpi eq, %arg1, %c0_i32 : i32
    %1 = arith.extui %0 : i1 to i32
    %c0_i32_0 = arith.constant 0 : i32
    %2 = arith.cmpi ne, %1, %c0_i32_0 : i32
    scf.if %2 {
      %c0_22 = arith.constant 0 : index
      %c0_23 = arith.constant 0 : index
      %c0_24 = arith.constant 0 : index
      %30 = vector.load %arg2[%c0_22, %c0_23, %c0_24] : memref<1x8x32xf32, #tpu.memory_space<vmem>>, vector<1x8x32xf32>
      %31 = vector.shape_cast %30 : vector<1x8x32xf32> to vector<8x32xf32>
      %c0_25 = arith.constant 0 : index
      %c0_26 = arith.constant 0 : index
      %32 = vector.load %arg3[%c0_25, %c0_26] : memref<32x96xf32, #tpu.memory_space<vmem>>, vector<32x96xf32>
      %cst_27 = arith.constant dense<0.000000e+00> : vector<8x96xf32>
      %33 = tpu.matmul %31, %32, %cst_27 {dimension_numbers = #tpu.dot_dimension_numbers<[1], [0], [0], [1], [0, 0, 1, 1], [], []>} : vector<8x32xf32>, vector<32x96xf32>, vector<8x96xf32> -> vector<8x96xf32>
      %c0_28 = arith.constant 0 : index
      %c0_29 = arith.constant 0 : index
      %34 = vector.load %arg4[%c0_28, %c0_29] : memref<1x96xf32, #tpu.memory_space<vmem>>, vector<1x96xf32>
      %35 = vector.broadcast %34 : vector<1x96xf32> to vector<8x96xf32>
      %36 = arith.addf %33, %35 : vector<8x96xf32>
      %37 = vector.extract_strided_slice %36 {offsets = [0, 0], sizes = [8, 32], strides = [1, 1]} : vector<8x96xf32> to vector<8x32xf32>
      %38 = vector.shape_cast %37 : vector<8x32xf32> to vector<8x4x8xf32>
      %39 = tpu.transpose %38, [1, 0, 2] : vector<8x4x8xf32> -> vector<4x8x8xf32>
      %c0_30 = arith.constant 0 : index
      %c0_31 = arith.constant 0 : index
      %c0_32 = arith.constant 0 : index
      %40 = vector.load %arg8[%c0_30, %c0_31, %c0_32] : memref<4x8x8xf32, #tpu.memory_space<vmem>>, vector<4x8x8xf32>
      tpu.vector_store %arg8[%c0_30, %c0_31, %c0_32], %39 {strides = array<i32>} : memref<4x8x8xf32, #tpu.memory_space<vmem>>, vector<4x8x8xf32>,
      %41 = vector.extract_strided_slice %36 {offsets = [0, 32], sizes = [8, 32], strides = [1, 1]} : vector<8x96xf32> to vector<8x32xf32>
      %42 = vector.shape_cast %41 : vector<8x32xf32> to vector<8x4x8xf32>
      %43 = tpu.transpose %42, [1, 0, 2] : vector<8x4x8xf32> -> vector<4x8x8xf32>
      %c0_33 = arith.constant 0 : index
      %c0_34 = arith.constant 0 : index
      %c0_35 = arith.constant 0 : index
      %44 = vector.load %arg9[%c0_33, %c0_34, %c0_35] : memref<4x8x8xf32, #tpu.memory_space<vmem>>, vector<4x8x8xf32>
      tpu.vector_store %arg9[%c0_33, %c0_34, %c0_35], %43 {strides = array<i32>} : memref<4x8x8xf32, #tpu.memory_space<vmem>>, vector<4x8x8xf32>,
      %45 = vector.extract_strided_slice %36 {offsets = [0, 64], sizes = [8, 32], strides = [1, 1]} : vector<8x96xf32> to vector<8x32xf32>
      %46 = vector.shape_cast %45 : vector<8x32xf32> to vector<8x4x8xf32>
      %47 = tpu.transpose %46, [1, 0, 2] : vector<8x4x8xf32> -> vector<4x8x8xf32>
      %c0_36 = arith.constant 0 : index
      %c0_37 = arith.constant 0 : index
      %c0_38 = arith.constant 0 : index
      %48 = vector.load %arg10[%c0_36, %c0_37, %c0_38] : memref<4x8x8xf32, #tpu.memory_space<vmem>>, vector<4x8x8xf32>
      tpu.vector_store %arg10[%c0_36, %c0_37, %c0_38], %47 {strides = array<i32>} : memref<4x8x8xf32, #tpu.memory_space<vmem>>, vector<4x8x8xf32>,
    } else {
    }
    %c8_i32 = arith.constant 8 : i32
    %3 = arith.muli %arg1, %c8_i32 : i32
    %4 = tpu.assume_multiple %3, 8 : i32
    %c0 = arith.constant 0 : index
    %5 = arith.index_cast %4 : i32 to index
    %c0_1 = arith.constant 0 : index
    %6 = vector.load %arg8[%c0, %5, %c0_1] : memref<4x8x8xf32, #tpu.memory_space<vmem>>, vector<4x8x8xf32>
    %c0_2 = arith.constant 0 : index
    %c0_3 = arith.constant 0 : index
    %c0_4 = arith.constant 0 : index
    %7 = vector.load %arg9[%c0_2, %c0_3, %c0_4] : memref<4x8x8xf32, #tpu.memory_space<vmem>>, vector<4x8x8xf32>
    %c0_5 = arith.constant 0 : index
    %c0_6 = arith.constant 0 : index
    %c0_7 = arith.constant 0 : index
    %8 = vector.load %arg10[%c0_5, %c0_6, %c0_7] : memref<4x8x8xf32, #tpu.memory_space<vmem>>, vector<4x8x8xf32>
    %cst = arith.constant dense<0.000000e+00> : vector<4x8x8xf32>
    %9 = tpu.matmul %6, %7, %cst {dimension_numbers = #tpu.dot_dimension_numbers<[2], [2], [1], [1], [0, 0, 0, 1, 1, 1], [0], [0]>} : vector<4x8x8xf32>, vector<4x8x8xf32>, vector<4x8x8xf32> -> vector<4x8x8xf32>
    %c0_8 = arith.constant 0 : index
    %c0_9 = arith.constant 0 : index
    %c0_10 = arith.constant 0 : index
    %10 = vector.load %arg5[%c0_8, %c0_9, %c0_10] : memref<1x1x8xf32, #tpu.memory_space<vmem>>, vector<1x1x8xf32>
    %11 = vector.broadcast %10 : vector<1x1x8xf32> to vector<4x8x8xf32>
    %12 = arith.addf %9, %11 : vector<4x8x8xf32>
    %c0_11 = arith.constant 0 : index
    %c0_12 = arith.constant 0 : index
    %c0_13 = arith.constant 0 : index
    %c0_14 = arith.constant 0 : index
    %13 = vector.load %arg7[%c0_11, %c0_12, %c0_13, %c0_14] : memref<1x4x8x8xf32, #tpu.memory_space<vmem>>, vector<1x4x8x8xf32>
    %14 = vector.shape_cast %13 : vector<1x4x8x8xf32> to vector<4x8x8xf32>
    %15 = vector.shape_cast %12 : vector<4x8x8xf32> to vector<1x4x8x8xf32>
    tpu.vector_store %arg7[%c0_11, %c0_12, %c0_13, %c0_14], %15 {strides = array<i32>} : memref<1x4x8x8xf32, #tpu.memory_space<vmem>>, vector<1x4x8x8xf32>,
    %cst_15 = arith.constant dense<0xFF800000> : vector<4x8xf32>
    %16 = vector.multi_reduction <maximumf>, %12, %cst_15 [2] : vector<4x8x8xf32> to vector<4x8xf32>
    %17 = vector.shape_cast %16 : vector<4x8xf32> to vector<4x8x1xf32>
    %18 = vector.broadcast %17 : vector<4x8x1xf32> to vector<4x8x8xf32>
    %19 = arith.subf %12, %18 : vector<4x8x8xf32>
    %20 = math.exp %19 : vector<4x8x8xf32>
    %cst_16 = arith.constant dense<0.000000e+00> : vector<4x8xf32>
    %21 = vector.multi_reduction <add>, %20, %cst_16 [2] : vector<4x8x8xf32> to vector<4x8xf32>
    %cst_17 = arith.constant dense<0.000000e+00> : vector<4x8x8xf32>
    %22 = tpu.matmul %8, %20, %cst_17 {dimension_numbers = #tpu.dot_dimension_numbers<[1], [2], [2], [1], [0, 0, 0, 2, 1, 1], [0], [0]>} : vector<4x8x8xf32>, vector<4x8x8xf32>, vector<4x8x8xf32> -> vector<4x8x8xf32>
    %23 = vector.shape_cast %21 : vector<4x8xf32> to vector<4x1x8xf32>
    %24 = tpu.reciprocal %23 {approx = true} : vector<4x1x8xf32> -> vector<4x1x8xf32>
    %25 = vector.broadcast %24 : vector<4x1x8xf32> to vector<4x8x8xf32>
    %26 = arith.mulf %22, %25 : vector<4x8x8xf32>
    %c0_18 = arith.constant 0 : index
    %c0_19 = arith.constant 0 : index
    %c0_20 = arith.constant 0 : index
    %c0_21 = arith.constant 0 : index
    %27 = vector.load %arg6[%c0_18, %c0_19, %c0_20, %c0_21] : memref<1x4x8x8xf32, #tpu.memory_space<vmem>>, vector<1x4x8x8xf32>
    %28 = vector.shape_cast %27 : vector<1x4x8x8xf32> to vector<4x8x8xf32>
    %29 = vector.shape_cast %26 : vector<4x8x8xf32> to vector<1x4x8x8xf32>
    tpu.vector_store %arg6[%c0_18, %c0_19, %c0_20, %c0_21], %29 {strides = array<i32>} : memref<1x4x8x8xf32, #tpu.memory_space<vmem>>, vector<1x4x8x8xf32>,
    return
  }
  func.func @transform_0(%arg0: i32, %arg1: i32) -> (i32, i32, i32) {
    %c0_i32 = arith.constant 0 : i32
    %c0_i32_0 = arith.constant 0 : i32
    %c0_i32_1 = arith.constant 0 : i32
    return %arg0, %c0_i32, %c0_i32_0 : i32, i32, i32
  }
  func.func @transform_1(%arg0: i32, %arg1: i32) -> (i32, i32) {
    %c0_i32 = arith.constant 0 : i32
    %c0_i32_0 = arith.constant 0 : i32
    %c0_i32_1 = arith.constant 0 : i32
    return %c0_i32, %c0_i32_0 : i32, i32
  }
  func.func @transform_2(%arg0: i32, %arg1: i32) -> (i32, i32) {
    %c0_i32 = arith.constant 0 : i32
    %c0_i32_0 = arith.constant 0 : i32
    %c0_i32_1 = arith.constant 0 : i32
    return %c0_i32, %c0_i32_0 : i32, i32
  }
  func.func @transform_3(%arg0: i32, %arg1: i32) -> (i32, i32, i32) {
    %c0_i32 = arith.constant 0 : i32
    %c0_i32_0 = arith.constant 0 : i32
    %c0_i32_1 = arith.constant 0 : i32
    return %arg0, %c0_i32, %c0_i32_0 : i32, i32, i32
  }
  func.func @transform_4(%arg0: i32, %arg1: i32) -> (i32, i32, i32, i32) {
    %c0_i32 = arith.constant 0 : i32
    %c0_i32_0 = arith.constant 0 : i32
    %c0_i32_1 = arith.constant 0 : i32
    return %arg0, %c0_i32, %c0_i32_0, %arg1 : i32, i32, i32, i32
  }
  func.func @transform_5(%arg0: i32, %arg1: i32) -> (i32, i32, i32, i32) {
    %c0_i32 = arith.constant 0 : i32
    %c0_i32_0 = arith.constant 0 : i32
    %c0_i32_1 = arith.constant 0 : i32
    return %arg0, %c0_i32, %arg1, %c0_i32_0 : i32, i32, i32, i32
  }
}

</mosaic_0001>

<llo_original>
// kernel: tpu_custom_call.1
$region0: #{tpu_custom_call.1}
  #allocation0 [shape = 'u32[]', space=smem, size = 0x4, offset = 0x4, fixed_abs, tag = 'smem constant byte address 0x4 - core index']
  #allocation1 [shape = 'u32[144,128]{1,0:T(1,128)}', space=vmem, size = 0x12000, scoped, tag = 'internal scratch']
  #allocation2 [shape = 'f32[4,8,8]{2,1,0:T(8,128)}', space=vmem, size = 0x4000, scoped, tag = 'scratch operand']
  #allocation3 [shape = 'f32[4,8,8]{2,1,0:T(8,128)}', space=vmem, size = 0x4000, scoped, tag = 'scratch operand']
  #allocation4 [shape = 'f32[4,8,8]{2,1,0:T(8,128)}', space=vmem, size = 0x4000, scoped, tag = 'scratch operand']
  %s0 = inlined_call_operand.hbm [shape: f32[2,8,32], index: 0, kind: input, shape index: {}]
  %s1 = inlined_call_operand.hbm [shape: f32[32,96], index: 1, kind: input, shape index: {}]
  %s2 = inlined_call_operand.hbm [shape: f32[1,96], index: 2, kind: input, shape index: {}]
  %s3 = inlined_call_operand.hbm [shape: f32[2,1,8], index: 3, kind: input, shape index: {}]
  %s4 = inlined_call_operand.hbm [shape: f32[2,4,8,8], index: 4, kind: output, shape index: {0}]
  %s5 = inlined_call_operand.hbm [shape: f32[2,4,8,8], index: 5, kind: output, shape index: {1}]
  %6 = xla_tuple %s4, %s5
  %s7 = sld [smem:[#allocation0]]
  $region77: #{tpu_custom_call.1} parent=0
    _
  %s9 = ssub.s32 1, %s7
  %s10 = scalar_select 0, %s9, %s7
  $region1: #{tpu_custom_call.1} parent=0
    #allocation5 [shape = 'u8[8192]{0}', space=vmem, size = 0x2000, scoped, tag = 'input window, operand 0']
    #allocation6 [shape = 's32[2]{0}', space=sflag, size = 0x8, scoped, tag = 'scoped memory for tpu_custom_call.1']
    #allocation7 [shape = 's32[2]{0}', space=sflag, size = 0x8, scoped, tag = 'scoped memory for tpu_custom_call.1']
    #allocation8 [shape = 'u8[16384]{0}', space=vmem, size = 0x4000, scoped, tag = 'input window, operand 1, single buffered']
    #allocation9 [shape = 's32[1]{0}', space=sflag, size = 0x4, scoped, tag = 'scoped memory for tpu_custom_call.1']
    #allocation10 [shape = 'u8[512]{0}', space=vmem, size = 0x400, scoped, tag = 'input window, operand 2, single buffered']
    #allocation11 [shape = 'u8[1024]{0}', space=vmem, size = 0x400, scoped, tag = 'input window, operand 3']
    #allocation12 [shape = 's32[2]{0}', space=sflag, size = 0x8, scoped, tag = 'scoped memory for tpu_custom_call.1']
    #allocation13 [shape = 'u8[32768]{0}', space=vmem, size = 0x8000, scoped, tag = 'output window, operand 0']
    #allocation14 [shape = 'u8[32768]{0}', space=vmem, size = 0x8000, scoped, tag = 'output window, operand 1']
    #allocation15 [shape = 's32[2]{0}', space=sflag, size = 0x8, scoped, tag = 'scoped memory for tpu_custom_call.1']
    %11 = vsyncpa [#allocation6], 0
    %s12 = scalar_lea.sflag [#allocation6], 1
    %13 = vsyncpa %s12, 0
    %14 = vsyncpa [#allocation9], 0
    %15 = vsyncpa [#allocation12], 0
    %s16 = scalar_lea.sflag [#allocation12], 1
    %17 = vsyncpa %s16, 0
    %18 = vsyncpa [#allocation7], 0
    %s19 = scalar_lea.sflag [#allocation7], 1
    %20 = vsyncpa %s19, 0
    %21 = vsyncpa [#allocation15], 0
    %s22 = scalar_lea.sflag [#allocation15], 1
    %23 = vsyncpa %s22, 0
    loop: start=0, step=1, limit=4
    $region2: #{tpu_custom_call.1} parent=1 // loop_pre_header
      _
    $region3: #{tpu_custom_call.1} parent=1 // loop_header
      %s25 = sphi 0, %s29
      %p26 = scmp.ge.s32.totalorder %s25, 4
      %s32 = sphi 0, %s44
      %s33 = sphi 0, %s40
      %s34 = sphi 0, %s32
      %s35 = sphi 0, %s33
      %s36 = sphi 0, %s34
      %s37 = sphi 0, %s35
      %s47 = sphi 0, %s49
      %s50 = sphi 0, %s47
      %s51 = sphi 0, %s50
      %s67 = sphi 0, %s51
      %s71 = sphi 0, %s71
      %s73 = sphi 0, %s71
      %s74 = sphi 0, %s73
      %s88 = sphi 0, %s74
      %s92 = sphi 0, %s92
      %s94 = sphi 0, %s92
      %s95 = sphi 0, %s94
      %s109 = sphi 0, %s95
      %s115 = sphi 0, %s117
      %s118 = sphi 0, %s115
      %s119 = sphi 0, %s118
      %s135 = sphi 0, %s119
      %s143 = sphi 0, %s145
      %s146 = sphi 0, %s143
      %s147 = sphi 0, %s146
      %s163 = sphi 0, %s147
      %s171 = sphi 0, %s173
      %s174 = sphi 0, %s171
      %s175 = sphi 0, %s174
      %s191 = sphi 0, %s175
    $region4: #{tpu_custom_call.1} parent=1 // loop_header_branch
      %28 = sbr.rel (%p26) target = $region8
    $region5: #{tpu_custom_call.1} parent=1 // loop_body
      %s30 = ssub.s32 %s25, 1
      %s31 = ssub.s32 %s25, 2
      %s38 = sadd.s32 1, %s33
      %p39 = scmp.ge.s32.totalorder %s38, 1
      %s40 = scalar_select %p39, 0, %s38
      %s41 = sadd.s32 1, %s32
      %s42 = scalar_select %p39, %s41, %s32
      %p43 = scmp.ge.s32.totalorder %s42, 2
      %s44 = scalar_select %p43, 0, %s42
      %s45 = ssub.s32 %s32, %s44
      %p46 = scmp.eq.s32.totalorder %s45, 0
      %s48 = sadd.s32 %s47, 1
      %s49 = scalar_select %p46, %s47, %s48
      %p52 = pneg %p46
      %p53 = scmp.eq.s32.totalorder %s25, 1
      %p54 = por %p52, %p53
      %p55 = scmp.ne.s32.totalorder %s47, %s50
      %p56 = scmp.eq.s32.totalorder %s25, 0
      %p57 = por %p55, %p56
      %p58 = scmp.ne.s32.totalorder %s47, %s50
      %p59 = scmp.eq.s32.totalorder %s30, 1
      %p60 = por %p58, %p59
      %p61 = scmp.ne.s32.totalorder %s50, %s51
      %p62 = scmp.eq.s32.totalorder %s30, 0
      %p63 = por %p61, %p62
      %p64 = scmp.ne.s32.totalorder %s50, %s51
      %p65 = scmp.eq.s32.totalorder %s31, 1
      %p66 = por %p64, %p65
      %p68 = scmp.ne.s32.totalorder %s51, %s67
      %p69 = scmp.eq.s32.totalorder %s31, 0
      %p70 = por %p68, %p69
      %s72 = sadd.s32 %s71, 1
      %p75 = scmp.eq.s32.totalorder %s25, 1
      %p76 = scmp.ne.s32.totalorder %s71, %s73
      %p77 = scmp.eq.s32.totalorder %s25, 0
      %p78 = por %p76, %p77
      %p79 = scmp.ne.s32.totalorder %s71, %s73
      %p80 = scmp.eq.s32.totalorder %s30, 1
      %p81 = por %p79, %p80
      %p82 = scmp.ne.s32.totalorder %s73, %s74
      %p83 = scmp.eq.s32.totalorder %s30, 0
      %p84 = por %p82, %p83
      %p85 = scmp.ne.s32.totalorder %s73, %s74
      %p86 = scmp.eq.s32.totalorder %s31, 1
      %p87 = por %p85, %p86
      %p89 = scmp.ne.s32.totalorder %s74, %s88
      %p90 = scmp.eq.s32.totalorder %s31, 0
      %p91 = por %p89, %p90
      %s93 = sadd.s32 %s92, 1
      %p96 = scmp.eq.s32.totalorder %s25, 1
      %p97 = scmp.ne.s32.totalorder %s92, %s94
      %p98 = scmp.eq.s32.totalorder %s25, 0
      %p99 = por %p97, %p98
      %p100 = scmp.ne.s32.totalorder %s92, %s94
      %p101 = scmp.eq.s32.totalorder %s30, 1
      %p102 = por %p100, %p101
      %p103 = scmp.ne.s32.totalorder %s94, %s95
      %p104 = scmp.eq.s32.totalorder %s30, 0
      %p105 = por %p103, %p104
      %p106 = scmp.ne.s32.totalorder %s94, %s95
      %p107 = scmp.eq.s32.totalorder %s31, 1
      %p108 = por %p106, %p107
      %p110 = scmp.ne.s32.totalorder %s95, %s109
      %p111 = scmp.eq.s32.totalorder %s31, 0
      %p112 = por %p110, %p111
      %s113 = ssub.s32 %s32, %s44
      %p114 = scmp.eq.s32.totalorder %s113, 0
      %s116 = sadd.s32 %s115, 1
      %s117 = scalar_select %p114, %s115, %s116
      %p120 = pneg %p114
      %p121 = scmp.eq.s32.totalorder %s25, 1
      %p122 = por %p120, %p121
      %p123 = scmp.ne.s32.totalorder %s115, %s118
      %p124 = scmp.eq.s32.totalorder %s25, 0
      %p125 = por %p123, %p124
      %p126 = scmp.ne.s32.totalorder %s115, %s118
      %p127 = scmp.eq.s32.totalorder %s30, 1
      %p128 = por %p126, %p127
      %p129 = scmp.ne.s32.totalorder %s118, %s119
      %p130 = scmp.eq.s32.totalorder %s30, 0
      %p131 = por %p129, %p130
      %p132 = scmp.ne.s32.totalorder %s118, %s119
      %p133 = scmp.eq.s32.totalorder %s31, 1
      %p134 = por %p132, %p133
      %p136 = scmp.ne.s32.totalorder %s119, %s135
      %p137 = scmp.eq.s32.totalorder %s31, 0
      %p138 = por %p136, %p137
      %s139 = ssub.s32 %s32, %s44
      %s140 = ssub.s32 %s33, %s40
      %s141 = sor.u32 %s139, %s140
      %p142 = scmp.eq.s32.totalorder %s141, 0
      %s144 = sadd.s32 %s143, 1
      %s145 = scalar_select %p142, %s143, %s144
      %p148 = pneg %p142
      %p149 = scmp.eq.s32.totalorder %s25, 1
      %p150 = por %p148, %p149
      %p151 = scmp.ne.s32.totalorder %s143, %s146
      %p152 = scmp.eq.s32.totalorder %s25, 0
      %p153 = por %p151, %p152
      %p154 = scmp.ne.s32.totalorder %s143, %s146
      %p155 = scmp.eq.s32.totalorder %s30, 1
      %p156 = por %p154, %p155
      %p157 = scmp.ne.s32.totalorder %s146, %s147
      %p158 = scmp.eq.s32.totalorder %s30, 0
      %p159 = por %p157, %p158
      %p160 = scmp.ne.s32.totalorder %s146, %s147
      %p161 = scmp.eq.s32.totalorder %s31, 1
      %p162 = por %p160, %p161
      %p164 = scmp.ne.s32.totalorder %s147, %s163
      %p165 = scmp.eq.s32.totalorder %s31, 0
      %p166 = por %p164, %p165
      %s167 = ssub.s32 %s32, %s44
      %s168 = ssub.s32 %s33, %s40
      %s169 = sor.u32 %s167, %s168
      %p170 = scmp.eq.s32.totalorder %s169, 0
      %s172 = sadd.s32 %s171, 1
      %s173 = scalar_select %p170, %s171, %s172
      %p176 = pneg %p170
      %p177 = scmp.eq.s32.totalorder %s25, 1
      %p178 = por %p176, %p177
      %p179 = scmp.ne.s32.totalorder %s171, %s174
      %p180 = scmp.eq.s32.totalorder %s25, 0
      %p181 = por %p179, %p180
      %p182 = scmp.ne.s32.totalorder %s171, %s174
      %p183 = scmp.eq.s32.totalorder %s30, 1
      %p184 = por %p182, %p183
      %p185 = scmp.ne.s32.totalorder %s174, %s175
      %p186 = scmp.eq.s32.totalorder %s30, 0
      %p187 = por %p185, %p186
      %p188 = scmp.ne.s32.totalorder %s174, %s175
      %p189 = scmp.eq.s32.totalorder %s31, 1
      %p190 = por %p188, %p189
      %p192 = scmp.ne.s32.totalorder %s175, %s191
      %p193 = scmp.eq.s32.totalorder %s31, 0
      %p194 = por %p192, %p193
      %p195 = scmp.le.s32.totalorder 1, %s25
      %p196 = scmp.lt.s32.totalorder %s25, 3
      %p197 = pnand %p195, %p196
      %p198 = pneg %p197
      // Predicated region
      $region9: #{tpu_custom_call.1} parent=5 // pred_check
        _
      $region10: #{tpu_custom_call.1} parent=5 // pred_check_branch
        %200 = sbr.rel (%p197) target = $region12
      $region11: #{tpu_custom_call.1} parent=5 // pred_region
        %s201 = ssub.s32 %s25, 1
        // Predicated region
        $region13: #{tpu_custom_call.1} parent=11 // pred_check
          %p202 = pneg %p84
        $region14: #{tpu_custom_call.1} parent=11 // pred_check_branch
          %204 = sbr.rel (%p202) target = $region16
        $region15: #{tpu_custom_call.1} parent=11 // pred_region
          %s206 = ssub.s32 512, 512
          %207 = vsyncadd [#allocation9], %s206
          %s208 = sshll.u32 [#allocation8], 4
          %s209 = int_to_ptr.vmem [resolvable:$true] %s208
          %214 = dma.hbm_to_vmem [thread:$0]  %s1, 512, %s209, [#allocation9], 128, 128, 8
        $region16: #{tpu_custom_call.1} parent=11 // pred_fallthru
          _
        // Predicated region
        $region17: #{tpu_custom_call.1} parent=11 // pred_check
          %p215 = pneg %p105
        $region18: #{tpu_custom_call.1} parent=11 // pred_check_branch
          %217 = sbr.rel (%p215) target = $region20
        $region19: #{tpu_custom_call.1} parent=11 // pred_region
          %s219 = ssub.s32 16, 16
          %220 = vsyncadd [#allocation9], %s219
          %s222 = sshll.u32 [#allocation10], 4
          %s223 = int_to_ptr.vmem [resolvable:$true] %s222
          %225 = dma.hbm_to_vmem [thread:$0]  %s2, 16, %s223, [#allocation9]
        $region20: #{tpu_custom_call.1} parent=11 // pred_fallthru
          _
      $region12: #{tpu_custom_call.1} parent=5 // pred_fallthru
        _
      %p226 = scmp.lt.s32.totalorder %s25, 2
      // Predicated region
      $region21: #{tpu_custom_call.1} parent=5 // pred_check
        %p227 = pneg %p226
      $region22: #{tpu_custom_call.1} parent=5 // pred_check_branch
        %229 = sbr.rel (%p227) target = $region24
      $region23: #{tpu_custom_call.1} parent=5 // pred_region
        // Predicated region
        $region25: #{tpu_custom_call.1} parent=23 // pred_check
          %p230 = pneg %p57
        $region26: #{tpu_custom_call.1} parent=23 // pred_check_branch
          %232 = sbr.rel (%p230) target = $region28
        $region27: #{tpu_custom_call.1} parent=23 // pred_region
          %s233 = sand.u32 %s47, 1
          %s234 = scalar_lea.sflag [#allocation6], %s233
          %s235 = sand.u32 %s47, 1
          %s236 = smul.addr %s235, 8
          %s237 = scalar_lea.vmem [#allocation5], %s236
          %s239 = ssub.s32 128, 128
          %240 = vsyncadd %s234, %s239
          %s241 = smul.addr %s32, 128
          %s242 = scalar_lea.hbm %s0, %s241
          %s244 = sshll.u32 %s237, 4
          %s245 = int_to_ptr.vmem [resolvable:$true] %s244
          %247 = dma.hbm_to_vmem [thread:$0]  %s242, 128, %s245, %s234
        $region28: #{tpu_custom_call.1} parent=23 // pred_fallthru
          _
        // Predicated region
        $region29: #{tpu_custom_call.1} parent=23 // pred_check
          %p248 = pneg %p125
        $region30: #{tpu_custom_call.1} parent=23 // pred_check_branch
          %250 = sbr.rel (%p248) target = $region32
        $region31: #{tpu_custom_call.1} parent=23 // pred_region
          %s251 = sand.u32 %s115, 1
          %s252 = scalar_lea.sflag [#allocation12], %s251
          %s253 = sand.u32 %s115, 1
          %s254 = scalar_lea.vmem [#allocation11], %s253
          %s256 = ssub.s32 16, 16
          %257 = vsyncadd %s252, %s256
          %s258 = smul.addr %s32, 16
          %s259 = scalar_lea.hbm %s3, %s258
          %s261 = sshll.u32 %s254, 4
          %s262 = int_to_ptr.vmem [resolvable:$true] %s261
          %264 = dma.hbm_to_vmem [thread:$0]  %s259, 16, %s262, %s252
        $region32: #{tpu_custom_call.1} parent=23 // pred_fallthru
          _
      $region24: #{tpu_custom_call.1} parent=5 // pred_fallthru
        _
      %p265 = scmp.le.s32.totalorder 1, %s25
      %p266 = scmp.lt.s32.totalorder %s25, 3
      %p267 = pnand %p265, %p266
      %p268 = pneg %p267
      // Predicated region
      $region33: #{tpu_custom_call.1} parent=5 // pred_check
        _
      $region34: #{tpu_custom_call.1} parent=5 // pred_check_branch
        %270 = sbr.rel (%p267) target = $region36
      $region35: #{tpu_custom_call.1} parent=5 // pred_region
        %s271 = ssub.s32 %s25, 1
        %s272 = sand.u32 %s50, 1
        %s273 = scalar_lea.sflag [#allocation6], %s272
        %s274 = sand.u32 %s50, 1
        %s275 = smul.addr %s274, 8
        %s276 = scalar_lea.vmem [#allocation5], %s275
        // Predicated region
        $region37: #{tpu_custom_call.1} parent=35 // pred_check
          %p277 = pneg %p63
        $region38: #{tpu_custom_call.1} parent=35 // pred_check_branch
          %279 = sbr.rel (%p277) target = $region40
        $region39: #{tpu_custom_call.1} parent=35 // pred_region
          %280 = dma.done %s273, 128
        $region40: #{tpu_custom_call.1} parent=35 // pred_fallthru
          _
        // Predicated region
        $region41: #{tpu_custom_call.1} parent=35 // pred_check
          %p281 = pneg %p84
        $region42: #{tpu_custom_call.1} parent=35 // pred_check_branch
          %283 = sbr.rel (%p281) target = $region44
        $region43: #{tpu_custom_call.1} parent=35 // pred_region
          %284 = dma.done [#allocation9], 512
        $region44: #{tpu_custom_call.1} parent=35 // pred_fallthru
          _
        // Predicated region
        $region45: #{tpu_custom_call.1} parent=35 // pred_check
          %p285 = pneg %p105
        $region46: #{tpu_custom_call.1} parent=35 // pred_check_branch
          %287 = sbr.rel (%p285) target = $region48
        $region47: #{tpu_custom_call.1} parent=35 // pred_region
          %288 = dma.done [#allocation9], 16
        $region48: #{tpu_custom_call.1} parent=35 // pred_fallthru
          _
        %s289 = sand.u32 %s118, 1
        %s290 = scalar_lea.sflag [#allocation12], %s289
        %s291 = sand.u32 %s118, 1
        %s292 = scalar_lea.vmem [#allocation11], %s291
        // Predicated region
        $region49: #{tpu_custom_call.1} parent=35 // pred_check
          %p293 = pneg %p131
        $region50: #{tpu_custom_call.1} parent=35 // pred_check_branch
          %295 = sbr.rel (%p293) target = $region52
        $region51: #{tpu_custom_call.1} parent=35 // pred_region
          %296 = dma.done %s290, 16
        $region52: #{tpu_custom_call.1} parent=35 // pred_fallthru
          _
        %s297 = sand.u32 %s50, 1
        %s298 = scalar_lea.sflag [#allocation6], %s297
        %s299 = sand.u32 %s50, 1
        %s300 = smul.addr %s299, 8
        %s301 = scalar_lea.vmem [#allocation5], %s300
        %p302 = pneg %p63
        %p303 = pneg %p60
        %p304 = pneg %p84
        %p305 = pneg %p81
        %p306 = pneg %p105
        %p307 = pneg %p102
        %s308 = sand.u32 %s118, 1
        %s309 = scalar_lea.sflag [#allocation12], %s308
        %s310 = sand.u32 %s118, 1
        %s311 = scalar_lea.vmem [#allocation11], %s310
        %p312 = pneg %p131
        %p313 = pneg %p128
        %p314 = pneg %p159
        %p315 = pneg %p156
        %s316 = sand.u32 %s146, 1
        %s317 = scalar_lea.sflag [#allocation7], %s316
        %s318 = sand.u32 %s146, 1
        %s319 = smul.addr %s318, 32
        %s320 = scalar_lea.vmem [#allocation13], %s319
        %p321 = pneg %p187
        %p322 = pneg %p184
        %s323 = sand.u32 %s174, 1
        %s324 = scalar_lea.sflag [#allocation15], %s323
        %s325 = sand.u32 %s174, 1
        %s326 = smul.addr %s325, 32
        %s327 = scalar_lea.vmem [#allocation14], %s326
        %p328 = scmp.eq.s32.totalorder %s35, 0
        // Predicated region
        $region53: #{tpu_custom_call.1} parent=35 // pred_check
          %p329 = pneg %p328
        $region54: #{tpu_custom_call.1} parent=35 // pred_check_branch
          %331 = sbr.rel (%p329) target = $region56
        $region55: #{tpu_custom_call.1} parent=35 // pred_region
          %v332 = vld [vmem:[%s276] sm:$0xff]
          %v333 = vld [vmem:[#allocation8] sm:$0xff]
          %v334 = vld [vmem:[#allocation8 + $0x8] sm:$0xff]
          %v335 = vld [vmem:[#allocation8 + $0x10] sm:$0xff]
          %v336 = vld [vmem:[#allocation8 + $0x18] sm:$0xff]
          %v337 = vld [vmem:[#allocation10] sm:$0x1]
          %v339 = vlaneseq
          %v340 = vshrl.u32 %v339, 7
          %v341 = vsub.s32 0, %v340
          %v342 = vrot.slane %v337, %v341
          %vm344 = vcmask 261120
          %v346 = vsel %vm344, %v332, 0
          %348 = vmatprep.subr.mxu0 0.0
          %349 = vmatpush1.msra.mxu0 %v333
          %350 = vmatprep.subr.mxu0 0.0
          %351 = vmatpush1.msra.mxu0 %v334
          %352 = vmatprep.subr.mxu0 0.0
          %353 = vmatpush1.msra.mxu0 %v335
          %354 = vmatprep.subr.mxu0 0.0
          %355 = vmatpush1.msra.mxu0 %v336
          %356 = vmatprep.subr.mxu0 0.0
          %357 = vmatpush1.msra.mxu0 0.0
          %358 = vmatprep.subr.mxu0 0.0
          %359 = vmatpush1.msra.mxu0 0.0
          %360 = vmatprep.subr.mxu0 0.0
          %361 = vmatpush1.msra.mxu0 0.0
          %362 = vmatprep.subr.mxu0 0.0
          %363 = vmatpush1.msra.mxu0 0.0
          %364 = vmatprep.subr.mxu0 0.0
          %365 = vmatpush1.msra.mxu0 0.0
          %366 = vmatprep.subr.mxu0 0.0
          %367 = vmatpush1.msra.mxu0 0.0
          %368 = vmatprep.subr.mxu0 0.0
          %369 = vmatpush1.msra.mxu0 0.0
          %370 = vmatprep.subr.mxu0 0.0
          %371 = vmatpush1.msra.mxu0 0.0
          %372 = vmatprep.subr.mxu0 0.0
          %373 = vmatpush1.msra.mxu0 0.0
          %374 = vmatprep.subr.mxu0 0.0
          %375 = vmatpush1.msra.mxu0 0.0
          %376 = vmatprep.subr.mxu0 0.0
          %377 = vmatpush1.msra.mxu0 0.0
          %378 = vmatprep.subr.mxu0 0.0
          %379 = vmatpush1.msra.mxu0 0.0
          %380 = vmatprep.subr.mxu0 0.0
          %381 = vmatpush1.msra.mxu0 0.0
          %382 = vmatprep.subr.mxu0 0.0
          %383 = vmatpush1.msra.mxu0 0.0
          %384 = vmatprep.subr.mxu0 0.0
          %385 = vmatpush1.msra.mxu0 0.0
          %386 = vmatprep.subr.mxu0 0.0
          %387 = vmatpush1.msra.mxu0 0.0
          %388 = vmatprep.subr.mxu0 0.0
          %389 = vmatpush1.msra.mxu0 0.0
          %390 = vmatprep.subr.mxu0 0.0
          %391 = vmatpush1.msra.mxu0 0.0
          %392 = vmatprep.subr.mxu0 0.0
          %393 = vmatpush1.msra.mxu0 0.0
          %394 = vmatprep.subr.mxu0 0.0
          %395 = vmatpush1.msra.mxu0 0.0
          %396 = vmatprep.subr.mxu0 0.0
          %397 = vmatpush1.msra.mxu0 0.0
          %398 = vmatprep.subr.mxu0 0.0
          %399 = vmatpush1.msra.mxu0 0.0
          %400 = vmatprep.subr.mxu0 0.0
          %401 = vmatpush1.msra.mxu0 0.0
          %402 = vmatprep.subr.mxu0 0.0
          %403 = vmatpush1.msra.mxu0 0.0
          %404 = vmatprep.subr.mxu0 0.0
          %405 = vmatpush1.msra.mxu0 0.0
          %406 = vmatprep.subr.mxu0 0.0
          %407 = vmatpush1.msra.mxu0 0.0
          %408 = vmatprep.subr.mxu0 0.0
          %409 = vmatpush1.msra.mxu0 0.0
          %410 = vmatprep.subr.mxu0 0.0
          %411 = vmatpush1.msra.mxu0 0.0
          %412 = vmatprep.mubr.f32.mxu0 0.0
          %413 = vmatmul.mubr.f32.gmra.mrb[0].mxu0 %v346
          %v414 = vpop.f32.mrb[0].mxu0
          %v415 = vadd.f32 %v342, %v414
          %v416 = vpop.f32.mrb[0].mxu0
          %417 = vdwg.mxu0
          %419 = vrot.lane.b32.xlu0 %v415, 120
          %v420 = vpop.permute.xlu0 %419
          %422 = vrot.lane.b32.xlu0 %v415, 112
          %v423 = vpop.permute.xlu0 %422
          %425 = vrot.lane.b32.xlu0 %v415, 104
          %v426 = vpop.permute.xlu0 %425
          %v428 = vcombine.low %v415, %v423
          %v429 = vcombine.high %v415, %v423
          %v431 = vunpack.c.l.s4 1983009808
          %v432 = vunpack.c.0.s8 %v431
          %v433 = vlaneseq
          %v434 = vshrl.u32 %v433, 7
          %v435 = vsub.s32 %v432, %v434
          %v436 = vrot.slane %v428, %v435
          %v438 = vunpack.c.l.s4 1983009808
          %v439 = vunpack.c.0.s8 %v438
          %v440 = vlaneseq
          %v441 = vshrl.u32 %v440, 7
          %v442 = vsub.s32 %v439, %v441
          %v443 = vrot.slane %v429, %v442
          %v444 = vcombine.low %v420, %v426
          %v445 = vcombine.high %v420, %v426
          %v447 = vunpack.c.l.s4 1983009808
          %v448 = vunpack.c.0.s8 %v447
          %v449 = vlaneseq
          %v450 = vshrl.u32 %v449, 7
          %v451 = vsub.s32 %v448, %v450
          %v452 = vrot.slane %v444, %v451
          %v454 = vunpack.c.l.s4 1983009808
          %v455 = vunpack.c.0.s8 %v454
          %v456 = vlaneseq
          %v457 = vshrl.u32 %v456, 7
          %v458 = vsub.s32 %v455, %v457
          %v459 = vrot.slane %v445, %v458
          %v460 = vcombine.low %v436, %v452
          %v461 = vcombine.high %v436, %v452
          %v463 = vunpack.c.l.s4 1934713408
          %v464 = vunpack.c.0.s8 %v463
          %v465 = vlaneseq
          %v466 = vshrl.u32 %v465, 7
          %v467 = vsub.s32 %v464, %v466
          %v468 = vrot.slane %v460, %v467
          %v470 = vunpack.c.l.s4 1934713408
          %v471 = vunpack.c.0.s8 %v470
          %v472 = vlaneseq
          %v473 = vshrl.u32 %v472, 7
          %v474 = vsub.s32 %v471, %v473
          %v475 = vrot.slane %v461, %v474
          %v476 = vcombine.low %v443, %v459
          %v477 = vcombine.high %v443, %v459
          %v479 = vunpack.c.l.s4 1934713408
          %v480 = vunpack.c.0.s8 %v479
          %v481 = vlaneseq
          %v482 = vshrl.u32 %v481, 7
          %v483 = vsub.s32 %v480, %v482
          %v484 = vrot.slane %v476, %v483
          %v486 = vunpack.c.l.s4 1934713408
          %v487 = vunpack.c.0.s8 %v486
          %v488 = vlaneseq
          %v489 = vshrl.u32 %v488, 7
          %v490 = vsub.s32 %v487, %v489
          %v491 = vrot.slane %v477, %v490
          %v492 = vcombine.high %v468, 0.0
          %v493 = vcombine.high %v475, 0.0
          %v494 = vcombine.high %v484, 0.0
          %v495 = vcombine.high %v491, 0.0
          %v496 = vcombine.low %v468, %v475
          %v498 = vunpack.c.l.s4 1983009808
          %v499 = vunpack.c.0.s8 %v498
          %v500 = vlaneseq
          %v501 = vshrl.u32 %v500, 7
          %v502 = vsub.s32 %v499, %v501
          %v503 = vrot.slane %v496, %v502
          %v504 = vcombine.low %v492, %v493
          %v506 = vunpack.c.l.s4 1983009808
          %v507 = vunpack.c.0.s8 %v506
          %v508 = vlaneseq
          %v509 = vshrl.u32 %v508, 7
          %v510 = vsub.s32 %v507, %v509
          %v511 = vrot.slane %v504, %v510
          %v512 = vcombine.low %v484, %v491
          %v514 = vunpack.c.l.s4 1983009808
          %v515 = vunpack.c.0.s8 %v514
          %v516 = vlaneseq
          %v517 = vshrl.u32 %v516, 7
          %v518 = vsub.s32 %v515, %v517
          %v519 = vrot.slane %v512, %v518
          %v520 = vcombine.low %v494, %v495
          %v522 = vunpack.c.l.s4 1983009808
          %v523 = vunpack.c.0.s8 %v522
          %v524 = vlaneseq
          %v525 = vshrl.u32 %v524, 7
          %v526 = vsub.s32 %v523, %v525
          %v527 = vrot.slane %v520, %v526
          %v528 = vcombine.low %v503, %v511
          %v529 = vcombine.high %v503, %v511
          %v531 = vunpack.c.l.s4 1934713408
          %v532 = vunpack.c.0.s8 %v531
          %v533 = vlaneseq
          %v534 = vshrl.u32 %v533, 7
          %v535 = vsub.s32 %v532, %v534
          %v536 = vrot.slane %v528, %v535
          %v538 = vunpack.c.l.s4 1934713408
          %v539 = vunpack.c.0.s8 %v538
          %v540 = vlaneseq
          %v541 = vshrl.u32 %v540, 7
          %v542 = vsub.s32 %v539, %v541
          %v543 = vrot.slane %v529, %v542
          %v544 = vcombine.low %v519, %v527
          %v545 = vcombine.high %v519, %v527
          %v547 = vunpack.c.l.s4 1934713408
          %v548 = vunpack.c.0.s8 %v547
          %v549 = vlaneseq
          %v550 = vshrl.u32 %v549, 7
          %v551 = vsub.s32 %v548, %v550
          %v552 = vrot.slane %v544, %v551
          %v554 = vunpack.c.l.s4 1934713408
          %v555 = vunpack.c.0.s8 %v554
          %v556 = vlaneseq
          %v557 = vshrl.u32 %v556, 7
          %v558 = vsub.s32 %v555, %v557
          %v559 = vrot.slane %v545, %v558
          %v560 = vcombine.low %v536, %v552
          %v561 = vcombine.high %v536, %v552
          %v562 = vcombine.low %v543, %v559
          %v563 = vcombine.high %v543, %v559
          %vm564 = vcmask 64512
          %565 = vst.msk [vmem:[#allocation2] sm:$0xff] %vm564, %v560
          %566 = vst.msk [vmem:[#allocation2 + $0x8] sm:$0xff] %vm564, %v561
          %567 = vst.msk [vmem:[#allocation2 + $0x10] sm:$0xff] %vm564, %v562
          %568 = vst.msk [vmem:[#allocation2 + $0x18] sm:$0xff] %vm564, %v563
          %569 = vrot.lane.b32.xlu0 %v415, 96
          %v570 = vpop.permute.xlu0 %569
          %571 = vrot.lane.b32.xlu0 %v420, 96
          %v572 = vpop.permute.xlu0 %571
          %573 = vrot.lane.b32.xlu0 %v423, 96
          %v574 = vpop.permute.xlu0 %573
          %575 = vrot.lane.b32.xlu0 %v426, 96
          %v576 = vpop.permute.xlu0 %575
          %v581 = vcombine.low %v570, %v574
          %v582 = vcombine.high %v570, %v574
          %v584 = vunpack.c.l.s4 1983009808
          %v585 = vunpack.c.0.s8 %v584
          %v586 = vlaneseq
          %v587 = vshrl.u32 %v586, 7
          %v588 = vsub.s32 %v585, %v587
          %v589 = vrot.slane %v581, %v588
          %v591 = vunpack.c.l.s4 1983009808
          %v592 = vunpack.c.0.s8 %v591
          %v593 = vlaneseq
          %v594 = vshrl.u32 %v593, 7
          %v595 = vsub.s32 %v592, %v594
          %v596 = vrot.slane %v582, %v595
          %v597 = vcombine.low %v572, %v576
          %v598 = vcombine.high %v572, %v576
          %v600 = vunpack.c.l.s4 1983009808
          %v601 = vunpack.c.0.s8 %v600
          %v602 = vlaneseq
          %v603 = vshrl.u32 %v602, 7
          %v604 = vsub.s32 %v601, %v603
          %v605 = vrot.slane %v597, %v604
          %v607 = vunpack.c.l.s4 1983009808
          %v608 = vunpack.c.0.s8 %v607
          %v609 = vlaneseq
          %v610 = vshrl.u32 %v609, 7
          %v611 = vsub.s32 %v608, %v610
          %v612 = vrot.slane %v598, %v611
          %v613 = vcombine.low %v589, %v605
          %v614 = vcombine.high %v589, %v605
          %v616 = vunpack.c.l.s4 1934713408
          %v617 = vunpack.c.0.s8 %v616
          %v618 = vlaneseq
          %v619 = vshrl.u32 %v618, 7
          %v620 = vsub.s32 %v617, %v619
          %v621 = vrot.slane %v613, %v620
          %v623 = vunpack.c.l.s4 1934713408
          %v624 = vunpack.c.0.s8 %v623
          %v625 = vlaneseq
          %v626 = vshrl.u32 %v625, 7
          %v627 = vsub.s32 %v624, %v626
          %v628 = vrot.slane %v614, %v627
          %v629 = vcombine.low %v596, %v612
          %v630 = vcombine.high %v596, %v612
          %v632 = vunpack.c.l.s4 1934713408
          %v633 = vunpack.c.0.s8 %v632
          %v634 = vlaneseq
          %v635 = vshrl.u32 %v634, 7
          %v636 = vsub.s32 %v633, %v635
          %v637 = vrot.slane %v629, %v636
          %v639 = vunpack.c.l.s4 1934713408
          %v640 = vunpack.c.0.s8 %v639
          %v641 = vlaneseq
          %v642 = vshrl.u32 %v641, 7
          %v643 = vsub.s32 %v640, %v642
          %v644 = vrot.slane %v630, %v643
          %v645 = vcombine.high %v621, 0.0
          %v646 = vcombine.high %v628, 0.0
          %v647 = vcombine.high %v637, 0.0
          %v648 = vcombine.high %v644, 0.0
          %v649 = vcombine.low %v621, %v628
          %v651 = vunpack.c.l.s4 1983009808
          %v652 = vunpack.c.0.s8 %v651
          %v653 = vlaneseq
          %v654 = vshrl.u32 %v653, 7
          %v655 = vsub.s32 %v652, %v654
          %v656 = vrot.slane %v649, %v655
          %v657 = vcombine.low %v645, %v646
          %v659 = vunpack.c.l.s4 1983009808
          %v660 = vunpack.c.0.s8 %v659
          %v661 = vlaneseq
          %v662 = vshrl.u32 %v661, 7
          %v663 = vsub.s32 %v660, %v662
          %v664 = vrot.slane %v657, %v663
          %v665 = vcombine.low %v637, %v644
          %v667 = vunpack.c.l.s4 1983009808
          %v668 = vunpack.c.0.s8 %v667
          %v669 = vlaneseq
          %v670 = vshrl.u32 %v669, 7
          %v671 = vsub.s32 %v668, %v670
          %v672 = vrot.slane %v665, %v671
          %v673 = vcombine.low %v647, %v648
          %v675 = vunpack.c.l.s4 1983009808
          %v676 = vunpack.c.0.s8 %v675
          %v677 = vlaneseq
          %v678 = vshrl.u32 %v677, 7
          %v679 = vsub.s32 %v676, %v678
          %v680 = vrot.slane %v673, %v679
          %v681 = vcombine.low %v656, %v664
          %v682 = vcombine.high %v656, %v664
          %v684 = vunpack.c.l.s4 1934713408
          %v685 = vunpack.c.0.s8 %v684
          %v686 = vlaneseq
          %v687 = vshrl.u32 %v686, 7
          %v688 = vsub.s32 %v685, %v687
          %v689 = vrot.slane %v681, %v688
          %v691 = vunpack.c.l.s4 1934713408
          %v692 = vunpack.c.0.s8 %v691
          %v693 = vlaneseq
          %v694 = vshrl.u32 %v693, 7
          %v695 = vsub.s32 %v692, %v694
          %v696 = vrot.slane %v682, %v695
          %v697 = vcombine.low %v672, %v680
          %v698 = vcombine.high %v672, %v680
          %v700 = vunpack.c.l.s4 1934713408
          %v701 = vunpack.c.0.s8 %v700
          %v702 = vlaneseq
          %v703 = vshrl.u32 %v702, 7
          %v704 = vsub.s32 %v701, %v703
          %v705 = vrot.slane %v697, %v704
          %v707 = vunpack.c.l.s4 1934713408
          %v708 = vunpack.c.0.s8 %v707
          %v709 = vlaneseq
          %v710 = vshrl.u32 %v709, 7
          %v711 = vsub.s32 %v708, %v710
          %v712 = vrot.slane %v698, %v711
          %v713 = vcombine.low %v689, %v705
          %v714 = vcombine.high %v689, %v705
          %v715 = vcombine.low %v696, %v712
          %v716 = vcombine.high %v696, %v712
          %717 = vst.msk [vmem:[#allocation3] sm:$0xff] %vm564, %v713
          %718 = vst.msk [vmem:[#allocation3 + $0x8] sm:$0xff] %vm564, %v714
          %719 = vst.msk [vmem:[#allocation3 + $0x10] sm:$0xff] %vm564, %v715
          %720 = vst.msk [vmem:[#allocation3 + $0x18] sm:$0xff] %vm564, %v716
          %721 = vrot.lane.b32.xlu0 %v415, 64
          %v722 = vpop.permute.xlu0 %721
          %723 = vrot.lane.b32.xlu0 %v420, 64
          %v724 = vpop.permute.xlu0 %723
          %725 = vrot.lane.b32.xlu0 %v423, 64
          %v726 = vpop.permute.xlu0 %725
          %727 = vrot.lane.b32.xlu0 %v426, 64
          %v728 = vpop.permute.xlu0 %727
          %v733 = vcombine.low %v722, %v726
          %v734 = vcombine.high %v722, %v726
          %v736 = vunpack.c.l.s4 1983009808
          %v737 = vunpack.c.0.s8 %v736
          %v738 = vlaneseq
          %v739 = vshrl.u32 %v738, 7
          %v740 = vsub.s32 %v737, %v739
          %v741 = vrot.slane %v733, %v740
          %v743 = vunpack.c.l.s4 1983009808
          %v744 = vunpack.c.0.s8 %v743
          %v745 = vlaneseq
          %v746 = vshrl.u32 %v745, 7
          %v747 = vsub.s32 %v744, %v746
          %v748 = vrot.slane %v734, %v747
          %v749 = vcombine.low %v724, %v728
          %v750 = vcombine.high %v724, %v728
          %v752 = vunpack.c.l.s4 1983009808
          %v753 = vunpack.c.0.s8 %v752
          %v754 = vlaneseq
          %v755 = vshrl.u32 %v754, 7
          %v756 = vsub.s32 %v753, %v755
          %v757 = vrot.slane %v749, %v756
          %v759 = vunpack.c.l.s4 1983009808
          %v760 = vunpack.c.0.s8 %v759
          %v761 = vlaneseq
          %v762 = vshrl.u32 %v761, 7
          %v763 = vsub.s32 %v760, %v762
          %v764 = vrot.slane %v750, %v763
          %v765 = vcombine.low %v741, %v757
          %v766 = vcombine.high %v741, %v757
          %v768 = vunpack.c.l.s4 1934713408
          %v769 = vunpack.c.0.s8 %v768
          %v770 = vlaneseq
          %v771 = vshrl.u32 %v770, 7
          %v772 = vsub.s32 %v769, %v771
          %v773 = vrot.slane %v765, %v772
          %v775 = vunpack.c.l.s4 1934713408
          %v776 = vunpack.c.0.s8 %v775
          %v777 = vlaneseq
          %v778 = vshrl.u32 %v777, 7
          %v779 = vsub.s32 %v776, %v778
          %v780 = vrot.slane %v766, %v779
          %v781 = vcombine.low %v748, %v764
          %v782 = vcombine.high %v748, %v764
          %v784 = vunpack.c.l.s4 1934713408
          %v785 = vunpack.c.0.s8 %v784
          %v786 = vlaneseq
          %v787 = vshrl.u32 %v786, 7
          %v788 = vsub.s32 %v785, %v787
          %v789 = vrot.slane %v781, %v788
          %v791 = vunpack.c.l.s4 1934713408
          %v792 = vunpack.c.0.s8 %v791
          %v793 = vlaneseq
          %v794 = vshrl.u32 %v793, 7
          %v795 = vsub.s32 %v792, %v794
          %v796 = vrot.slane %v782, %v795
          %v797 = vcombine.high %v773, 0.0
          %v798 = vcombine.high %v780, 0.0
          %v799 = vcombine.high %v789, 0.0
          %v800 = vcombine.high %v796, 0.0
          %v801 = vcombine.low %v773, %v780
          %v803 = vunpack.c.l.s4 1983009808
          %v804 = vunpack.c.0.s8 %v803
          %v805 = vlaneseq
          %v806 = vshrl.u32 %v805, 7
          %v807 = vsub.s32 %v804, %v806
          %v808 = vrot.slane %v801, %v807
          %v809 = vcombine.low %v797, %v798
          %v811 = vunpack.c.l.s4 1983009808
          %v812 = vunpack.c.0.s8 %v811
          %v813 = vlaneseq
          %v814 = vshrl.u32 %v813, 7
          %v815 = vsub.s32 %v812, %v814
          %v816 = vrot.slane %v809, %v815
          %v817 = vcombine.low %v789, %v796
          %v819 = vunpack.c.l.s4 1983009808
          %v820 = vunpack.c.0.s8 %v819
          %v821 = vlaneseq
          %v822 = vshrl.u32 %v821, 7
          %v823 = vsub.s32 %v820, %v822
          %v824 = vrot.slane %v817, %v823
          %v825 = vcombine.low %v799, %v800
          %v827 = vunpack.c.l.s4 1983009808
          %v828 = vunpack.c.0.s8 %v827
          %v829 = vlaneseq
          %v830 = vshrl.u32 %v829, 7
          %v831 = vsub.s32 %v828, %v830
          %v832 = vrot.slane %v825, %v831
          %v833 = vcombine.low %v808, %v816
          %v834 = vcombine.high %v808, %v816
          %v836 = vunpack.c.l.s4 1934713408
          %v837 = vunpack.c.0.s8 %v836
          %v838 = vlaneseq
          %v839 = vshrl.u32 %v838, 7
          %v840 = vsub.s32 %v837, %v839
          %v841 = vrot.slane %v833, %v840
          %v843 = vunpack.c.l.s4 1934713408
          %v844 = vunpack.c.0.s8 %v843
          %v845 = vlaneseq
          %v846 = vshrl.u32 %v845, 7
          %v847 = vsub.s32 %v844, %v846
          %v848 = vrot.slane %v834, %v847
          %v849 = vcombine.low %v824, %v832
          %v850 = vcombine.high %v824, %v832
          %v852 = vunpack.c.l.s4 1934713408
          %v853 = vunpack.c.0.s8 %v852
          %v854 = vlaneseq
          %v855 = vshrl.u32 %v854, 7
          %v856 = vsub.s32 %v853, %v855
          %v857 = vrot.slane %v849, %v856
          %v859 = vunpack.c.l.s4 1934713408
          %v860 = vunpack.c.0.s8 %v859
          %v861 = vlaneseq
          %v862 = vshrl.u32 %v861, 7
          %v863 = vsub.s32 %v860, %v862
          %v864 = vrot.slane %v850, %v863
          %v865 = vcombine.low %v841, %v857
          %v866 = vcombine.high %v841, %v857
          %v867 = vcombine.low %v848, %v864
          %v868 = vcombine.high %v848, %v864
          %869 = vst.msk [vmem:[#allocation4] sm:$0xff] %vm564, %v865
          %870 = vst.msk [vmem:[#allocation4 + $0x8] sm:$0xff] %vm564, %v866
          %871 = vst.msk [vmem:[#allocation4 + $0x10] sm:$0xff] %vm564, %v867
          %872 = vst.msk [vmem:[#allocation4 + $0x18] sm:$0xff] %vm564, %v868
        $region56: #{tpu_custom_call.1} parent=35 // pred_fallthru
          _
        %s873 = smul.u32 %s35, 8
        %s874 = scalar_lea.vmem [#allocation2], %s873
        %v875 = vld [vmem:[%s874] sm:$0xff]
        %v876 = vld [vmem:[%s874 + $0x8] sm:$0xff]
        %v877 = vld [vmem:[%s874 + $0x10] sm:$0xff]
        %v878 = vld [vmem:[%s874 + $0x18] sm:$0xff]
        %v879 = vld [vmem:[#allocation3] sm:$0xff]
        %v880 = vld [vmem:[#allocation3 + $0x8] sm:$0xff]
        %v881 = vld [vmem:[#allocation3 + $0x10] sm:$0xff]
        %v882 = vld [vmem:[#allocation3 + $0x18] sm:$0xff]
        %v883 = vld [vmem:[#allocation4] sm:$0xff]
        %v884 = vld [vmem:[#allocation4 + $0x8] sm:$0xff]
        %v885 = vld [vmem:[#allocation4 + $0x10] sm:$0xff]
        %v886 = vld [vmem:[#allocation4 + $0x18] sm:$0xff]
        %v887 = vld [vmem:[%s292] sm:$0x1]
        %v889 = vlaneseq
        %v890 = vshrl.u32 %v889, 7
        %v891 = vsub.s32 0, %v890
        %v892 = vrot.slane %v887, %v891
        %vm894 = vcmask 64512
        %v896 = vsel %vm894, %v875, 0
        %v899 = vsel %vm894, %v879, 0
        %901 = vmatprep.subr.mxu0 0.0
        %902 = vmatpush1.xpose.msra.mxu0 %v899
        %903 = vmatprep.subr.mxu0 0.0
        %904 = vmatpush1.xpose.msra.mxu0 0.0
        %905 = vmatprep.subr.mxu0 0.0
        %906 = vmatpush1.xpose.msra.mxu0 0.0
        %907 = vmatprep.subr.mxu0 0.0
        %908 = vmatpush1.xpose.msra.mxu0 0.0
        %909 = vmatprep.subr.mxu0 0.0
        %910 = vmatpush1.xpose.msra.mxu0 0.0
        %911 = vmatprep.subr.mxu0 0.0
        %912 = vmatpush1.xpose.msra.mxu0 0.0
        %913 = vmatprep.subr.mxu0 0.0
        %914 = vmatpush1.xpose.msra.mxu0 0.0
        %915 = vmatprep.subr.mxu0 0.0
        %916 = vmatpush1.xpose.msra.mxu0 0.0
        %917 = vmatprep.subr.mxu0 0.0
        %918 = vmatpush1.xpose.msra.mxu0 0.0
        %919 = vmatprep.subr.mxu0 0.0
        %920 = vmatpush1.xpose.msra.mxu0 0.0
        %921 = vmatprep.subr.mxu0 0.0
        %922 = vmatpush1.xpose.msra.mxu0 0.0
        %923 = vmatprep.subr.mxu0 0.0
        %924 = vmatpush1.xpose.msra.mxu0 0.0
        %925 = vmatprep.subr.mxu0 0.0
        %926 = vmatpush1.xpose.msra.mxu0 0.0
        %927 = vmatprep.subr.mxu0 0.0
        %928 = vmatpush1.xpose.msra.mxu0 0.0
        %929 = vmatprep.subr.mxu0 0.0
        %930 = vmatpush1.xpose.msra.mxu0 0.0
        %931 = vmatprep.subr.mxu0 0.0
        %932 = vmatpush1.xpose.msra.mxu0 0.0
        %933 = vmatprep.subr.mxu0 0.0
        %934 = vmatpush1.xpose.msra.mxu0 0.0
        %935 = vmatprep.subr.mxu0 0.0
        %936 = vmatpush1.xpose.msra.mxu0 0.0
        %937 = vmatprep.subr.mxu0 0.0
        %938 = vmatpush1.xpose.msra.mxu0 0.0
        %939 = vmatprep.subr.mxu0 0.0
        %940 = vmatpush1.xpose.msra.mxu0 0.0
        %941 = vmatprep.subr.mxu0 0.0
        %942 = vmatpush1.xpose.msra.mxu0 0.0
        %943 = vmatprep.subr.mxu0 0.0
        %944 = vmatpush1.xpose.msra.mxu0 0.0
        %945 = vmatprep.subr.mxu0 0.0
        %946 = vmatpush1.xpose.msra.mxu0 0.0
        %947 = vmatprep.subr.mxu0 0.0
        %948 = vmatpush1.xpose.msra.mxu0 0.0
        %949 = vmatprep.subr.mxu0 0.0
        %950 = vmatpush1.xpose.msra.mxu0 0.0
        %951 = vmatprep.subr.mxu0 0.0
        %952 = vmatpush1.xpose.msra.mxu0 0.0
        %953 = vmatprep.subr.mxu0 0.0
        %954 = vmatpush1.xpose.msra.mxu0 0.0
        %955 = vmatprep.subr.mxu0 0.0
        %956 = vmatpush1.xpose.msra.mxu0 0.0
        %957 = vmatprep.subr.mxu0 0.0
        %958 = vmatpush1.xpose.msra.mxu0 0.0
        %959 = vmatprep.subr.mxu0 0.0
        %960 = vmatpush1.xpose.msra.mxu0 0.0
        %961 = vmatprep.subr.mxu0 0.0
        %962 = vmatpush1.xpose.msra.mxu0 0.0
        %963 = vmatprep.subr.mxu0 0.0
        %964 = vmatpush1.xpose.msra.mxu0 0.0
        %965 = vmatprep.mubr.f32.mxu0 0.0
        %966 = vmatmul.mubr.f32.gmra.mrb[0].mxu0 %v896
        %v967 = vpop.f32.mrb[0].mxu0
        %v968 = vadd.f32 %v892, %v967
        %v969 = vpop.f32.mrb[0].mxu0
        %970 = vdwg.mxu0
        %v972 = vsel %vm894, %v876, 0
        %v975 = vsel %vm894, %v880, 0
        %977 = vmatprep.subr.mxu0 0.0
        %978 = vmatpush1.xpose.msra.mxu0 %v975
        %979 = vmatprep.subr.mxu0 0.0
        %980 = vmatpush1.xpose.msra.mxu0 0.0
        %981 = vmatprep.subr.mxu0 0.0
        %982 = vmatpush1.xpose.msra.mxu0 0.0
        %983 = vmatprep.subr.mxu0 0.0
        %984 = vmatpush1.xpose.msra.mxu0 0.0
        %985 = vmatprep.subr.mxu0 0.0
        %986 = vmatpush1.xpose.msra.mxu0 0.0
        %987 = vmatprep.subr.mxu0 0.0
        %988 = vmatpush1.xpose.msra.mxu0 0.0
        %989 = vmatprep.subr.mxu0 0.0
        %990 = vmatpush1.xpose.msra.mxu0 0.0
        %991 = vmatprep.subr.mxu0 0.0
        %992 = vmatpush1.xpose.msra.mxu0 0.0
        %993 = vmatprep.subr.mxu0 0.0
        %994 = vmatpush1.xpose.msra.mxu0 0.0
        %995 = vmatprep.subr.mxu0 0.0
        %996 = vmatpush1.xpose.msra.mxu0 0.0
        %997 = vmatprep.subr.mxu0 0.0
        %998 = vmatpush1.xpose.msra.mxu0 0.0
        %999 = vmatprep.subr.mxu0 0.0
        %1000 = vmatpush1.xpose.msra.mxu0 0.0
        %1001 = vmatprep.subr.mxu0 0.0
        %1002 = vmatpush1.xpose.msra.mxu0 0.0
        %1003 = vmatprep.subr.mxu0 0.0
        %1004 = vmatpush1.xpose.msra.mxu0 0.0
        %1005 = vmatprep.subr.mxu0 0.0
        %1006 = vmatpush1.xpose.msra.mxu0 0.0
        %1007 = vmatprep.subr.mxu0 0.0
        %1008 = vmatpush1.xpose.msra.mxu0 0.0
        %1009 = vmatprep.subr.mxu0 0.0
        %1010 = vmatpush1.xpose.msra.mxu0 0.0
        %1011 = vmatprep.subr.mxu0 0.0
        %1012 = vmatpush1.xpose.msra.mxu0 0.0
        %1013 = vmatprep.subr.mxu0 0.0
        %1014 = vmatpush1.xpose.msra.mxu0 0.0
        %1015 = vmatprep.subr.mxu0 0.0
        %1016 = vmatpush1.xpose.msra.mxu0 0.0
        %1017 = vmatprep.subr.mxu0 0.0
        %1018 = vmatpush1.xpose.msra.mxu0 0.0
        %1019 = vmatprep.subr.mxu0 0.0
        %1020 = vmatpush1.xpose.msra.mxu0 0.0
        %1021 = vmatprep.subr.mxu0 0.0
        %1022 = vmatpush1.xpose.msra.mxu0 0.0
        %1023 = vmatprep.subr.mxu0 0.0
        %1024 = vmatpush1.xpose.msra.mxu0 0.0
        %1025 = vmatprep.subr.mxu0 0.0
        %1026 = vmatpush1.xpose.msra.mxu0 0.0
        %1027 = vmatprep.subr.mxu0 0.0
        %1028 = vmatpush1.xpose.msra.mxu0 0.0
        %1029 = vmatprep.subr.mxu0 0.0
        %1030 = vmatpush1.xpose.msra.mxu0 0.0
        %1031 = vmatprep.subr.mxu0 0.0
        %1032 = vmatpush1.xpose.msra.mxu0 0.0
        %1033 = vmatprep.subr.mxu0 0.0
        %1034 = vmatpush1.xpose.msra.mxu0 0.0
        %1035 = vmatprep.subr.mxu0 0.0
        %1036 = vmatpush1.xpose.msra.mxu0 0.0
        %1037 = vmatprep.subr.mxu0 0.0
        %1038 = vmatpush1.xpose.msra.mxu0 0.0
        %1039 = vmatprep.subr.mxu0 0.0
        %1040 = vmatpush1.xpose.msra.mxu0 0.0
        %1041 = vmatprep.mubr.f32.mxu0 0.0
        %1042 = vmatmul.mubr.f32.gmra.mrb[0].mxu0 %v972
        %v1043 = vpop.f32.mrb[0].mxu0
        %v1044 = vadd.f32 %v892, %v1043
        %v1045 = vpop.f32.mrb[0].mxu0
        %1046 = vdwg.mxu0
        %v1048 = vsel %vm894, %v877, 0
        %v1051 = vsel %vm894, %v881, 0
        %1053 = vmatprep.subr.mxu0 0.0
        %1054 = vmatpush1.xpose.msra.mxu0 %v1051
        %1055 = vmatprep.subr.mxu0 0.0
        %1056 = vmatpush1.xpose.msra.mxu0 0.0
        %1057 = vmatprep.subr.mxu0 0.0
        %1058 = vmatpush1.xpose.msra.mxu0 0.0
        %1059 = vmatprep.subr.mxu0 0.0
        %1060 = vmatpush1.xpose.msra.mxu0 0.0
        %1061 = vmatprep.subr.mxu0 0.0
        %1062 = vmatpush1.xpose.msra.mxu0 0.0
        %1063 = vmatprep.subr.mxu0 0.0
        %1064 = vmatpush1.xpose.msra.mxu0 0.0
        %1065 = vmatprep.subr.mxu0 0.0
        %1066 = vmatpush1.xpose.msra.mxu0 0.0
        %1067 = vmatprep.subr.mxu0 0.0
        %1068 = vmatpush1.xpose.msra.mxu0 0.0
        %1069 = vmatprep.subr.mxu0 0.0
        %1070 = vmatpush1.xpose.msra.mxu0 0.0
        %1071 = vmatprep.subr.mxu0 0.0
        %1072 = vmatpush1.xpose.msra.mxu0 0.0
        %1073 = vmatprep.subr.mxu0 0.0
        %1074 = vmatpush1.xpose.msra.mxu0 0.0
        %1075 = vmatprep.subr.mxu0 0.0
        %1076 = vmatpush1.xpose.msra.mxu0 0.0
        %1077 = vmatprep.subr.mxu0 0.0
        %1078 = vmatpush1.xpose.msra.mxu0 0.0
        %1079 = vmatprep.subr.mxu0 0.0
        %1080 = vmatpush1.xpose.msra.mxu0 0.0
        %1081 = vmatprep.subr.mxu0 0.0
        %1082 = vmatpush1.xpose.msra.mxu0 0.0
        %1083 = vmatprep.subr.mxu0 0.0
        %1084 = vmatpush1.xpose.msra.mxu0 0.0
        %1085 = vmatprep.subr.mxu0 0.0
        %1086 = vmatpush1.xpose.msra.mxu0 0.0
        %1087 = vmatprep.subr.mxu0 0.0
        %1088 = vmatpush1.xpose.msra.mxu0 0.0
        %1089 = vmatprep.subr.mxu0 0.0
        %1090 = vmatpush1.xpose.msra.mxu0 0.0
        %1091 = vmatprep.subr.mxu0 0.0
        %1092 = vmatpush1.xpose.msra.mxu0 0.0
        %1093 = vmatprep.subr.mxu0 0.0
        %1094 = vmatpush1.xpose.msra.mxu0 0.0
        %1095 = vmatprep.subr.mxu0 0.0
        %1096 = vmatpush1.xpose.msra.mxu0 0.0
        %1097 = vmatprep.subr.mxu0 0.0
        %1098 = vmatpush1.xpose.msra.mxu0 0.0
        %1099 = vmatprep.subr.mxu0 0.0
        %1100 = vmatpush1.xpose.msra.mxu0 0.0
        %1101 = vmatprep.subr.mxu0 0.0
        %1102 = vmatpush1.xpose.msra.mxu0 0.0
        %1103 = vmatprep.subr.mxu0 0.0
        %1104 = vmatpush1.xpose.msra.mxu0 0.0
        %1105 = vmatprep.subr.mxu0 0.0
        %1106 = vmatpush1.xpose.msra.mxu0 0.0
        %1107 = vmatprep.subr.mxu0 0.0
        %1108 = vmatpush1.xpose.msra.mxu0 0.0
        %1109 = vmatprep.subr.mxu0 0.0
        %1110 = vmatpush1.xpose.msra.mxu0 0.0
        %1111 = vmatprep.subr.mxu0 0.0
        %1112 = vmatpush1.xpose.msra.mxu0 0.0
        %1113 = vmatprep.subr.mxu0 0.0
        %1114 = vmatpush1.xpose.msra.mxu0 0.0
        %1115 = vmatprep.subr.mxu0 0.0
        %1116 = vmatpush1.xpose.msra.mxu0 0.0
        %1117 = vmatprep.mubr.f32.mxu0 0.0
        %1118 = vmatmul.mubr.f32.gmra.mrb[0].mxu0 %v1048
        %v1119 = vpop.f32.mrb[0].mxu0
        %v1120 = vadd.f32 %v892, %v1119
        %v1121 = vpop.f32.mrb[0].mxu0
        %1122 = vdwg.mxu0
        %v1124 = vsel %vm894, %v878, 0
        %v1127 = vsel %vm894, %v882, 0
        %1129 = vmatprep.subr.mxu0 0.0
        %1130 = vmatpush1.xpose.msra.mxu0 %v1127
        %1131 = vmatprep.subr.mxu0 0.0
        %1132 = vmatpush1.xpose.msra.mxu0 0.0
        %1133 = vmatprep.subr.mxu0 0.0
        %1134 = vmatpush1.xpose.msra.mxu0 0.0
        %1135 = vmatprep.subr.mxu0 0.0
        %1136 = vmatpush1.xpose.msra.mxu0 0.0
        %1137 = vmatprep.subr.mxu0 0.0
        %1138 = vmatpush1.xpose.msra.mxu0 0.0
        %1139 = vmatprep.subr.mxu0 0.0
        %1140 = vmatpush1.xpose.msra.mxu0 0.0
        %1141 = vmatprep.subr.mxu0 0.0
        %1142 = vmatpush1.xpose.msra.mxu0 0.0
        %1143 = vmatprep.subr.mxu0 0.0
        %1144 = vmatpush1.xpose.msra.mxu0 0.0
        %1145 = vmatprep.subr.mxu0 0.0
        %1146 = vmatpush1.xpose.msra.mxu0 0.0
        %1147 = vmatprep.subr.mxu0 0.0
        %1148 = vmatpush1.xpose.msra.mxu0 0.0
        %1149 = vmatprep.subr.mxu0 0.0
        %1150 = vmatpush1.xpose.msra.mxu0 0.0
        %1151 = vmatprep.subr.mxu0 0.0
        %1152 = vmatpush1.xpose.msra.mxu0 0.0
        %1153 = vmatprep.subr.mxu0 0.0
        %1154 = vmatpush1.xpose.msra.mxu0 0.0
        %1155 = vmatprep.subr.mxu0 0.0
        %1156 = vmatpush1.xpose.msra.mxu0 0.0
        %1157 = vmatprep.subr.mxu0 0.0
        %1158 = vmatpush1.xpose.msra.mxu0 0.0
        %1159 = vmatprep.subr.mxu0 0.0
        %1160 = vmatpush1.xpose.msra.mxu0 0.0
        %1161 = vmatprep.subr.mxu0 0.0
        %1162 = vmatpush1.xpose.msra.mxu0 0.0
        %1163 = vmatprep.subr.mxu0 0.0
        %1164 = vmatpush1.xpose.msra.mxu0 0.0
        %1165 = vmatprep.subr.mxu0 0.0
        %1166 = vmatpush1.xpose.msra.mxu0 0.0
        %1167 = vmatprep.subr.mxu0 0.0
        %1168 = vmatpush1.xpose.msra.mxu0 0.0
        %1169 = vmatprep.subr.mxu0 0.0
        %1170 = vmatpush1.xpose.msra.mxu0 0.0
        %1171 = vmatprep.subr.mxu0 0.0
        %1172 = vmatpush1.xpose.msra.mxu0 0.0
        %1173 = vmatprep.subr.mxu0 0.0
        %1174 = vmatpush1.xpose.msra.mxu0 0.0
        %1175 = vmatprep.subr.mxu0 0.0
        %1176 = vmatpush1.xpose.msra.mxu0 0.0
        %1177 = vmatprep.subr.mxu0 0.0
        %1178 = vmatpush1.xpose.msra.mxu0 0.0
        %1179 = vmatprep.subr.mxu0 0.0
        %1180 = vmatpush1.xpose.msra.mxu0 0.0
        %1181 = vmatprep.subr.mxu0 0.0
        %1182 = vmatpush1.xpose.msra.mxu0 0.0
        %1183 = vmatprep.subr.mxu0 0.0
        %1184 = vmatpush1.xpose.msra.mxu0 0.0
        %1185 = vmatprep.subr.mxu0 0.0
        %1186 = vmatpush1.xpose.msra.mxu0 0.0
        %1187 = vmatprep.subr.mxu0 0.0
        %1188 = vmatpush1.xpose.msra.mxu0 0.0
        %1189 = vmatprep.subr.mxu0 0.0
        %1190 = vmatpush1.xpose.msra.mxu0 0.0
        %1191 = vmatprep.subr.mxu0 0.0
        %1192 = vmatpush1.xpose.msra.mxu0 0.0
        %1193 = vmatprep.mubr.f32.mxu0 0.0
        %1194 = vmatmul.mubr.f32.gmra.mrb[0].mxu0 %v1124
        %v1195 = vpop.f32.mrb[0].mxu0
        %v1196 = vadd.f32 %v892, %v1195
        %v1197 = vpop.f32.mrb[0].mxu0
        %1198 = vdwg.mxu0
        %1199 = vst.msk [vmem:[%s327] sm:$0xff] %vm894, %v968
        %1200 = vst.msk [vmem:[%s327 + $0x8] sm:$0xff] %vm894, %v1044
        %1201 = vst.msk [vmem:[%s327 + $0x10] sm:$0xff] %vm894, %v1120
        %1202 = vst.msk [vmem:[%s327 + $0x18] sm:$0xff] %vm894, %v1196
        %v1203 = vsel %vm894, %v968, -inf
        %1204 = vmax.xlane.f32.xlu0 %v1203
        %v1205 = vpop.xlane.xlu0 %1204
        %v1206 = vsel %vm894, %v1044, -inf
        %1207 = vmax.xlane.f32.xlu0 %v1206
        %v1208 = vpop.xlane.xlu0 %1207
        %v1209 = vsel %vm894, %v1120, -inf
        %1210 = vmax.xlane.f32.xlu0 %v1209
        %v1211 = vpop.xlane.xlu0 %1210
        %v1212 = vsel %vm894, %v1196, -inf
        %1213 = vmax.xlane.f32.xlu0 %v1212
        %v1214 = vpop.xlane.xlu0 %1213
        %v1215 = vsub.f32 %v968, %v1205
        %v1216 = vsub.f32 %v1044, %v1208
        %v1217 = vsub.f32 %v1120, %v1211
        %v1218 = vsub.f32 %v1196, %v1214
        %v1219 = vmul.f32 %v1215, 1.442695
        %v1220 = vpow.pop %v1219
        %v1221 = vmul.f32 %v1216, 1.442695
        %v1222 = vpow.pop %v1221
        %v1223 = vmul.f32 %v1217, 1.442695
        %v1224 = vpow.pop %v1223
        %v1225 = vmul.f32 %v1218, 1.442695
        %v1226 = vpow.pop %v1225
        %v1227 = vsel %vm894, %v1220, 0.0
        %1228 = vadd.xlane.f32.xlu0 %v1227
        %v1229 = vpop.xlane.xlu0 %1228
        %v1230 = vsel %vm894, %v1222, 0.0
        %1231 = vadd.xlane.f32.xlu0 %v1230
        %v1232 = vpop.xlane.xlu0 %1231
        %v1233 = vsel %vm894, %v1224, 0.0
        %1234 = vadd.xlane.f32.xlu0 %v1233
        %v1235 = vpop.xlane.xlu0 %1234
        %v1236 = vsel %vm894, %v1226, 0.0
        %1237 = vadd.xlane.f32.xlu0 %v1236
        %v1238 = vpop.xlane.xlu0 %1237
        %1239 = vxpose.xlu0.b32.start [1/16] %v883, 128
        %1240 = vxpose.xlu0.b32.cont [2/16] 0.0, 128
        %1241 = vxpose.xlu0.b32.cont [3/16] 0.0, 128
        %1242 = vxpose.xlu0.b32.cont [4/16] 0.0, 128
        %1243 = vxpose.xlu0.b32.cont [5/16] 0.0, 128
        %1244 = vxpose.xlu0.b32.cont [6/16] 0.0, 128
        %1245 = vxpose.xlu0.b32.cont [7/16] 0.0, 128
        %1246 = vxpose.xlu0.b32.cont [8/16] 0.0, 128
        %1247 = vxpose.xlu0.b32.cont [9/16] 0.0, 128
        %1248 = vxpose.xlu0.b32.cont [10/16] 0.0, 128
        %1249 = vxpose.xlu0.b32.cont [11/16] 0.0, 128
        %1250 = vxpose.xlu0.b32.cont [12/16] 0.0, 128
        %1251 = vxpose.xlu0.b32.cont [13/16] 0.0, 128
        %1252 = vxpose.xlu0.b32.cont [14/16] 0.0, 128
        %1253 = vxpose.xlu0.b32.cont [15/16] 0.0, 128
        %1254 = vxpose.xlu0.b32.end [16/16] 0.0, 128
        %v1255 = vpop.trf.xlu0
        %v1256 = vpop.trf.xlu0
        %v1257 = vpop.trf.xlu0
        %v1258 = vpop.trf.xlu0
        %v1259 = vpop.trf.xlu0
        %v1260 = vpop.trf.xlu0
        %v1261 = vpop.trf.xlu0
        %v1262 = vpop.trf.xlu0
        %v1263 = vpop.trf.xlu0
        %v1264 = vpop.trf.xlu0
        %v1265 = vpop.trf.xlu0
        %v1266 = vpop.trf.xlu0
        %v1267 = vpop.trf.xlu0
        %v1268 = vpop.trf.xlu0
        %v1269 = vpop.trf.xlu0
        %v1270 = vpop.trf.xlu0
        %v1272 = vsel %vm894, %v1255, 0
        %v1275 = vsel %vm894, %v1220, 0
        %1277 = vmatprep.subr.mxu0 0.0
        %1278 = vmatpush1.xpose.msra.mxu0 %v1275
        %1279 = vmatprep.subr.mxu0 0.0
        %1280 = vmatpush1.xpose.msra.mxu0 0.0
        %1281 = vmatprep.subr.mxu0 0.0
        %1282 = vmatpush1.xpose.msra.mxu0 0.0
        %1283 = vmatprep.subr.mxu0 0.0
        %1284 = vmatpush1.xpose.msra.mxu0 0.0
        %1285 = vmatprep.subr.mxu0 0.0
        %1286 = vmatpush1.xpose.msra.mxu0 0.0
        %1287 = vmatprep.subr.mxu0 0.0
        %1288 = vmatpush1.xpose.msra.mxu0 0.0
        %1289 = vmatprep.subr.mxu0 0.0
        %1290 = vmatpush1.xpose.msra.mxu0 0.0
        %1291 = vmatprep.subr.mxu0 0.0
        %1292 = vmatpush1.xpose.msra.mxu0 0.0
        %1293 = vmatprep.subr.mxu0 0.0
        %1294 = vmatpush1.xpose.msra.mxu0 0.0
        %1295 = vmatprep.subr.mxu0 0.0
        %1296 = vmatpush1.xpose.msra.mxu0 0.0
        %1297 = vmatprep.subr.mxu0 0.0
        %1298 = vmatpush1.xpose.msra.mxu0 0.0
        %1299 = vmatprep.subr.mxu0 0.0
        %1300 = vmatpush1.xpose.msra.mxu0 0.0
        %1301 = vmatprep.subr.mxu0 0.0
        %1302 = vmatpush1.xpose.msra.mxu0 0.0
        %1303 = vmatprep.subr.mxu0 0.0
        %1304 = vmatpush1.xpose.msra.mxu0 0.0
        %1305 = vmatprep.subr.mxu0 0.0
        %1306 = vmatpush1.xpose.msra.mxu0 0.0
        %1307 = vmatprep.subr.mxu0 0.0
        %1308 = vmatpush1.xpose.msra.mxu0 0.0
        %1309 = vmatprep.subr.mxu0 0.0
        %1310 = vmatpush1.xpose.msra.mxu0 0.0
        %1311 = vmatprep.subr.mxu0 0.0
        %1312 = vmatpush1.xpose.msra.mxu0 0.0
        %1313 = vmatprep.subr.mxu0 0.0
        %1314 = vmatpush1.xpose.msra.mxu0 0.0
        %1315 = vmatprep.subr.mxu0 0.0
        %1316 = vmatpush1.xpose.msra.mxu0 0.0
        %1317 = vmatprep.subr.mxu0 0.0
        %1318 = vmatpush1.xpose.msra.mxu0 0.0
        %1319 = vmatprep.subr.mxu0 0.0
        %1320 = vmatpush1.xpose.msra.mxu0 0.0
        %1321 = vmatprep.subr.mxu0 0.0
        %1322 = vmatpush1.xpose.msra.mxu0 0.0
        %1323 = vmatprep.subr.mxu0 0.0
        %1324 = vmatpush1.xpose.msra.mxu0 0.0
        %1325 = vmatprep.subr.mxu0 0.0
        %1326 = vmatpush1.xpose.msra.mxu0 0.0
        %1327 = vmatprep.subr.mxu0 0.0
        %1328 = vmatpush1.xpose.msra.mxu0 0.0
        %1329 = vmatprep.subr.mxu0 0.0
        %1330 = vmatpush1.xpose.msra.mxu0 0.0
        %1331 = vmatprep.subr.mxu0 0.0
        %1332 = vmatpush1.xpose.msra.mxu0 0.0
        %1333 = vmatprep.subr.mxu0 0.0
        %1334 = vmatpush1.xpose.msra.mxu0 0.0
        %1335 = vmatprep.subr.mxu0 0.0
        %1336 = vmatpush1.xpose.msra.mxu0 0.0
        %1337 = vmatprep.subr.mxu0 0.0
        %1338 = vmatpush1.xpose.msra.mxu0 0.0
        %1339 = vmatprep.subr.mxu0 0.0
        %1340 = vmatpush1.xpose.msra.mxu0 0.0
        %1341 = vmatprep.mubr.f32.mxu0 0.0
        %1342 = vmatmul.mubr.f32.gmra.mrb[0].mxu0 %v1272
        %v1343 = vpop.f32.mrb[0].mxu0
        %v1344 = vadd.f32 0.0, %v1343
        %v1345 = vpop.f32.mrb[0].mxu0
        %1346 = vdwg.mxu0
        %1347 = vxpose.xlu0.b32.start [1/16] %v884, 128
        %1348 = vxpose.xlu0.b32.cont [2/16] 0.0, 128
        %1349 = vxpose.xlu0.b32.cont [3/16] 0.0, 128
        %1350 = vxpose.xlu0.b32.cont [4/16] 0.0, 128
        %1351 = vxpose.xlu0.b32.cont [5/16] 0.0, 128
        %1352 = vxpose.xlu0.b32.cont [6/16] 0.0, 128
        %1353 = vxpose.xlu0.b32.cont [7/16] 0.0, 128
        %1354 = vxpose.xlu0.b32.cont [8/16] 0.0, 128
        %1355 = vxpose.xlu0.b32.cont [9/16] 0.0, 128
        %1356 = vxpose.xlu0.b32.cont [10/16] 0.0, 128
        %1357 = vxpose.xlu0.b32.cont [11/16] 0.0, 128
        %1358 = vxpose.xlu0.b32.cont [12/16] 0.0, 128
        %1359 = vxpose.xlu0.b32.cont [13/16] 0.0, 128
        %1360 = vxpose.xlu0.b32.cont [14/16] 0.0, 128
        %1361 = vxpose.xlu0.b32.cont [15/16] 0.0, 128
        %1362 = vxpose.xlu0.b32.end [16/16] 0.0, 128
        %v1363 = vpop.trf.xlu0
        %v1364 = vpop.trf.xlu0
        %v1365 = vpop.trf.xlu0
        %v1366 = vpop.trf.xlu0
        %v1367 = vpop.trf.xlu0
        %v1368 = vpop.trf.xlu0
        %v1369 = vpop.trf.xlu0
        %v1370 = vpop.trf.xlu0
        %v1371 = vpop.trf.xlu0
        %v1372 = vpop.trf.xlu0
        %v1373 = vpop.trf.xlu0
        %v1374 = vpop.trf.xlu0
        %v1375 = vpop.trf.xlu0
        %v1376 = vpop.trf.xlu0
        %v1377 = vpop.trf.xlu0
        %v1378 = vpop.trf.xlu0
        %v1380 = vsel %vm894, %v1363, 0
        %v1383 = vsel %vm894, %v1222, 0
        %1385 = vmatprep.subr.mxu0 0.0
        %1386 = vmatpush1.xpose.msra.mxu0 %v1383
        %1387 = vmatprep.subr.mxu0 0.0
        %1388 = vmatpush1.xpose.msra.mxu0 0.0
        %1389 = vmatprep.subr.mxu0 0.0
        %1390 = vmatpush1.xpose.msra.mxu0 0.0
        %1391 = vmatprep.subr.mxu0 0.0
        %1392 = vmatpush1.xpose.msra.mxu0 0.0
        %1393 = vmatprep.subr.mxu0 0.0
        %1394 = vmatpush1.xpose.msra.mxu0 0.0
        %1395 = vmatprep.subr.mxu0 0.0
        %1396 = vmatpush1.xpose.msra.mxu0 0.0
        %1397 = vmatprep.subr.mxu0 0.0
        %1398 = vmatpush1.xpose.msra.mxu0 0.0
        %1399 = vmatprep.subr.mxu0 0.0
        %1400 = vmatpush1.xpose.msra.mxu0 0.0
        %1401 = vmatprep.subr.mxu0 0.0
        %1402 = vmatpush1.xpose.msra.mxu0 0.0
        %1403 = vmatprep.subr.mxu0 0.0
        %1404 = vmatpush1.xpose.msra.mxu0 0.0
        %1405 = vmatprep.subr.mxu0 0.0
        %1406 = vmatpush1.xpose.msra.mxu0 0.0
        %1407 = vmatprep.subr.mxu0 0.0
        %1408 = vmatpush1.xpose.msra.mxu0 0.0
        %1409 = vmatprep.subr.mxu0 0.0
        %1410 = vmatpush1.xpose.msra.mxu0 0.0
        %1411 = vmatprep.subr.mxu0 0.0
        %1412 = vmatpush1.xpose.msra.mxu0 0.0
        %1413 = vmatprep.subr.mxu0 0.0
        %1414 = vmatpush1.xpose.msra.mxu0 0.0
        %1415 = vmatprep.subr.mxu0 0.0
        %1416 = vmatpush1.xpose.msra.mxu0 0.0
        %1417 = vmatprep.subr.mxu0 0.0
        %1418 = vmatpush1.xpose.msra.mxu0 0.0
        %1419 = vmatprep.subr.mxu0 0.0
        %1420 = vmatpush1.xpose.msra.mxu0 0.0
        %1421 = vmatprep.subr.mxu0 0.0
        %1422 = vmatpush1.xpose.msra.mxu0 0.0
        %1423 = vmatprep.subr.mxu0 0.0
        %1424 = vmatpush1.xpose.msra.mxu0 0.0
        %1425 = vmatprep.subr.mxu0 0.0
        %1426 = vmatpush1.xpose.msra.mxu0 0.0
        %1427 = vmatprep.subr.mxu0 0.0
        %1428 = vmatpush1.xpose.msra.mxu0 0.0
        %1429 = vmatprep.subr.mxu0 0.0
        %1430 = vmatpush1.xpose.msra.mxu0 0.0
        %1431 = vmatprep.subr.mxu0 0.0
        %1432 = vmatpush1.xpose.msra.mxu0 0.0
        %1433 = vmatprep.subr.mxu0 0.0
        %1434 = vmatpush1.xpose.msra.mxu0 0.0
        %1435 = vmatprep.subr.mxu0 0.0
        %1436 = vmatpush1.xpose.msra.mxu0 0.0
        %1437 = vmatprep.subr.mxu0 0.0
        %1438 = vmatpush1.xpose.msra.mxu0 0.0
        %1439 = vmatprep.subr.mxu0 0.0
        %1440 = vmatpush1.xpose.msra.mxu0 0.0
        %1441 = vmatprep.subr.mxu0 0.0
        %1442 = vmatpush1.xpose.msra.mxu0 0.0
        %1443 = vmatprep.subr.mxu0 0.0
        %1444 = vmatpush1.xpose.msra.mxu0 0.0
        %1445 = vmatprep.subr.mxu0 0.0
        %1446 = vmatpush1.xpose.msra.mxu0 0.0
        %1447 = vmatprep.subr.mxu0 0.0
        %1448 = vmatpush1.xpose.msra.mxu0 0.0
        %1449 = vmatprep.mubr.f32.mxu0 0.0
        %1450 = vmatmul.mubr.f32.gmra.mrb[0].mxu0 %v1380
        %v1451 = vpop.f32.mrb[0].mxu0
        %v1452 = vadd.f32 0.0, %v1451
        %v1453 = vpop.f32.mrb[0].mxu0
        %1454 = vdwg.mxu0
        %1455 = vxpose.xlu0.b32.start [1/16] %v885, 128
        %1456 = vxpose.xlu0.b32.cont [2/16] 0.0, 128
        %1457 = vxpose.xlu0.b32.cont [3/16] 0.0, 128
        %1458 = vxpose.xlu0.b32.cont [4/16] 0.0, 128
        %1459 = vxpose.xlu0.b32.cont [5/16] 0.0, 128
        %1460 = vxpose.xlu0.b32.cont [6/16] 0.0, 128
        %1461 = vxpose.xlu0.b32.cont [7/16] 0.0, 128
        %1462 = vxpose.xlu0.b32.cont [8/16] 0.0, 128
        %1463 = vxpose.xlu0.b32.cont [9/16] 0.0, 128
        %1464 = vxpose.xlu0.b32.cont [10/16] 0.0, 128
        %1465 = vxpose.xlu0.b32.cont [11/16] 0.0, 128
        %1466 = vxpose.xlu0.b32.cont [12/16] 0.0, 128
        %1467 = vxpose.xlu0.b32.cont [13/16] 0.0, 128
        %1468 = vxpose.xlu0.b32.cont [14/16] 0.0, 128
        %1469 = vxpose.xlu0.b32.cont [15/16] 0.0, 128
        %1470 = vxpose.xlu0.b32.end [16/16] 0.0, 128
        %v1471 = vpop.trf.xlu0
        %v1472 = vpop.trf.xlu0
        %v1473 = vpop.trf.xlu0
        %v1474 = vpop.trf.xlu0
        %v1475 = vpop.trf.xlu0
        %v1476 = vpop.trf.xlu0
        %v1477 = vpop.trf.xlu0
        %v1478 = vpop.trf.xlu0
        %v1479 = vpop.trf.xlu0
        %v1480 = vpop.trf.xlu0
        %v1481 = vpop.trf.xlu0
        %v1482 = vpop.trf.xlu0
        %v1483 = vpop.trf.xlu0
        %v1484 = vpop.trf.xlu0
        %v1485 = vpop.trf.xlu0
        %v1486 = vpop.trf.xlu0
        %v1488 = vsel %vm894, %v1471, 0
        %v1491 = vsel %vm894, %v1224, 0
        %1493 = vmatprep.subr.mxu0 0.0
        %1494 = vmatpush1.xpose.msra.mxu0 %v1491
        %1495 = vmatprep.subr.mxu0 0.0
        %1496 = vmatpush1.xpose.msra.mxu0 0.0
        %1497 = vmatprep.subr.mxu0 0.0
        %1498 = vmatpush1.xpose.msra.mxu0 0.0
        %1499 = vmatprep.subr.mxu0 0.0
        %1500 = vmatpush1.xpose.msra.mxu0 0.0
        %1501 = vmatprep.subr.mxu0 0.0
        %1502 = vmatpush1.xpose.msra.mxu0 0.0
        %1503 = vmatprep.subr.mxu0 0.0
        %1504 = vmatpush1.xpose.msra.mxu0 0.0
        %1505 = vmatprep.subr.mxu0 0.0
        %1506 = vmatpush1.xpose.msra.mxu0 0.0
        %1507 = vmatprep.subr.mxu0 0.0
        %1508 = vmatpush1.xpose.msra.mxu0 0.0
        %1509 = vmatprep.subr.mxu0 0.0
        %1510 = vmatpush1.xpose.msra.mxu0 0.0
        %1511 = vmatprep.subr.mxu0 0.0
        %1512 = vmatpush1.xpose.msra.mxu0 0.0
        %1513 = vmatprep.subr.mxu0 0.0
        %1514 = vmatpush1.xpose.msra.mxu0 0.0
        %1515 = vmatprep.subr.mxu0 0.0
        %1516 = vmatpush1.xpose.msra.mxu0 0.0
        %1517 = vmatprep.subr.mxu0 0.0
        %1518 = vmatpush1.xpose.msra.mxu0 0.0
        %1519 = vmatprep.subr.mxu0 0.0
        %1520 = vmatpush1.xpose.msra.mxu0 0.0
        %1521 = vmatprep.subr.mxu0 0.0
        %1522 = vmatpush1.xpose.msra.mxu0 0.0
        %1523 = vmatprep.subr.mxu0 0.0
        %1524 = vmatpush1.xpose.msra.mxu0 0.0
        %1525 = vmatprep.subr.mxu0 0.0
        %1526 = vmatpush1.xpose.msra.mxu0 0.0
        %1527 = vmatprep.subr.mxu0 0.0
        %1528 = vmatpush1.xpose.msra.mxu0 0.0
        %1529 = vmatprep.subr.mxu0 0.0
        %1530 = vmatpush1.xpose.msra.mxu0 0.0
        %1531 = vmatprep.subr.mxu0 0.0
        %1532 = vmatpush1.xpose.msra.mxu0 0.0
        %1533 = vmatprep.subr.mxu0 0.0
        %1534 = vmatpush1.xpose.msra.mxu0 0.0
        %1535 = vmatprep.subr.mxu0 0.0
        %1536 = vmatpush1.xpose.msra.mxu0 0.0
        %1537 = vmatprep.subr.mxu0 0.0
        %1538 = vmatpush1.xpose.msra.mxu0 0.0
        %1539 = vmatprep.subr.mxu0 0.0
        %1540 = vmatpush1.xpose.msra.mxu0 0.0
        %1541 = vmatprep.subr.mxu0 0.0
        %1542 = vmatpush1.xpose.msra.mxu0 0.0
        %1543 = vmatprep.subr.mxu0 0.0
        %1544 = vmatpush1.xpose.msra.mxu0 0.0
        %1545 = vmatprep.subr.mxu0 0.0
        %1546 = vmatpush1.xpose.msra.mxu0 0.0
        %1547 = vmatprep.subr.mxu0 0.0
        %1548 = vmatpush1.xpose.msra.mxu0 0.0
        %1549 = vmatprep.subr.mxu0 0.0
        %1550 = vmatpush1.xpose.msra.mxu0 0.0
        %1551 = vmatprep.subr.mxu0 0.0
        %1552 = vmatpush1.xpose.msra.mxu0 0.0
        %1553 = vmatprep.subr.mxu0 0.0
        %1554 = vmatpush1.xpose.msra.mxu0 0.0
        %1555 = vmatprep.subr.mxu0 0.0
        %1556 = vmatpush1.xpose.msra.mxu0 0.0
        %1557 = vmatprep.mubr.f32.mxu0 0.0
        %1558 = vmatmul.mubr.f32.gmra.mrb[0].mxu0 %v1488
        %v1559 = vpop.f32.mrb[0].mxu0
        %v1560 = vadd.f32 0.0, %v1559
        %v1561 = vpop.f32.mrb[0].mxu0
        %1562 = vdwg.mxu0
        %1563 = vxpose.xlu0.b32.start [1/16] %v886, 128
        %1564 = vxpose.xlu0.b32.cont [2/16] 0.0, 128
        %1565 = vxpose.xlu0.b32.cont [3/16] 0.0, 128
        %1566 = vxpose.xlu0.b32.cont [4/16] 0.0, 128
        %1567 = vxpose.xlu0.b32.cont [5/16] 0.0, 128
        %1568 = vxpose.xlu0.b32.cont [6/16] 0.0, 128
        %1569 = vxpose.xlu0.b32.cont [7/16] 0.0, 128
        %1570 = vxpose.xlu0.b32.cont [8/16] 0.0, 128
        %1571 = vxpose.xlu0.b32.cont [9/16] 0.0, 128
        %1572 = vxpose.xlu0.b32.cont [10/16] 0.0, 128
        %1573 = vxpose.xlu0.b32.cont [11/16] 0.0, 128
        %1574 = vxpose.xlu0.b32.cont [12/16] 0.0, 128
        %1575 = vxpose.xlu0.b32.cont [13/16] 0.0, 128
        %1576 = vxpose.xlu0.b32.cont [14/16] 0.0, 128
        %1577 = vxpose.xlu0.b32.cont [15/16] 0.0, 128
        %1578 = vxpose.xlu0.b32.end [16/16] 0.0, 128
        %v1579 = vpop.trf.xlu0
        %v1580 = vpop.trf.xlu0
        %v1581 = vpop.trf.xlu0
        %v1582 = vpop.trf.xlu0
        %v1583 = vpop.trf.xlu0
        %v1584 = vpop.trf.xlu0
        %v1585 = vpop.trf.xlu0
        %v1586 = vpop.trf.xlu0
        %v1587 = vpop.trf.xlu0
        %v1588 = vpop.trf.xlu0
        %v1589 = vpop.trf.xlu0
        %v1590 = vpop.trf.xlu0
        %v1591 = vpop.trf.xlu0
        %v1592 = vpop.trf.xlu0
        %v1593 = vpop.trf.xlu0
        %v1594 = vpop.trf.xlu0
        %v1596 = vsel %vm894, %v1579, 0
        %v1599 = vsel %vm894, %v1226, 0
        %1601 = vmatprep.subr.mxu0 0.0
        %1602 = vmatpush1.xpose.msra.mxu0 %v1599
        %1603 = vmatprep.subr.mxu0 0.0
        %1604 = vmatpush1.xpose.msra.mxu0 0.0
        %1605 = vmatprep.subr.mxu0 0.0
        %1606 = vmatpush1.xpose.msra.mxu0 0.0
        %1607 = vmatprep.subr.mxu0 0.0
        %1608 = vmatpush1.xpose.msra.mxu0 0.0
        %1609 = vmatprep.subr.mxu0 0.0
        %1610 = vmatpush1.xpose.msra.mxu0 0.0
        %1611 = vmatprep.subr.mxu0 0.0
        %1612 = vmatpush1.xpose.msra.mxu0 0.0
        %1613 = vmatprep.subr.mxu0 0.0
        %1614 = vmatpush1.xpose.msra.mxu0 0.0
        %1615 = vmatprep.subr.mxu0 0.0
        %1616 = vmatpush1.xpose.msra.mxu0 0.0
        %1617 = vmatprep.subr.mxu0 0.0
        %1618 = vmatpush1.xpose.msra.mxu0 0.0
        %1619 = vmatprep.subr.mxu0 0.0
        %1620 = vmatpush1.xpose.msra.mxu0 0.0
        %1621 = vmatprep.subr.mxu0 0.0
        %1622 = vmatpush1.xpose.msra.mxu0 0.0
        %1623 = vmatprep.subr.mxu0 0.0
        %1624 = vmatpush1.xpose.msra.mxu0 0.0
        %1625 = vmatprep.subr.mxu0 0.0
        %1626 = vmatpush1.xpose.msra.mxu0 0.0
        %1627 = vmatprep.subr.mxu0 0.0
        %1628 = vmatpush1.xpose.msra.mxu0 0.0
        %1629 = vmatprep.subr.mxu0 0.0
        %1630 = vmatpush1.xpose.msra.mxu0 0.0
        %1631 = vmatprep.subr.mxu0 0.0
        %1632 = vmatpush1.xpose.msra.mxu0 0.0
        %1633 = vmatprep.subr.mxu0 0.0
        %1634 = vmatpush1.xpose.msra.mxu0 0.0
        %1635 = vmatprep.subr.mxu0 0.0
        %1636 = vmatpush1.xpose.msra.mxu0 0.0
        %1637 = vmatprep.subr.mxu0 0.0
        %1638 = vmatpush1.xpose.msra.mxu0 0.0
        %1639 = vmatprep.subr.mxu0 0.0
        %1640 = vmatpush1.xpose.msra.mxu0 0.0
        %1641 = vmatprep.subr.mxu0 0.0
        %1642 = vmatpush1.xpose.msra.mxu0 0.0
        %1643 = vmatprep.subr.mxu0 0.0
        %1644 = vmatpush1.xpose.msra.mxu0 0.0
        %1645 = vmatprep.subr.mxu0 0.0
        %1646 = vmatpush1.xpose.msra.mxu0 0.0
        %1647 = vmatprep.subr.mxu0 0.0
        %1648 = vmatpush1.xpose.msra.mxu0 0.0
        %1649 = vmatprep.subr.mxu0 0.0
        %1650 = vmatpush1.xpose.msra.mxu0 0.0
        %1651 = vmatprep.subr.mxu0 0.0
        %1652 = vmatpush1.xpose.msra.mxu0 0.0
        %1653 = vmatprep.subr.mxu0 0.0
        %1654 = vmatpush1.xpose.msra.mxu0 0.0
        %1655 = vmatprep.subr.mxu0 0.0
        %1656 = vmatpush1.xpose.msra.mxu0 0.0
        %1657 = vmatprep.subr.mxu0 0.0
        %1658 = vmatpush1.xpose.msra.mxu0 0.0
        %1659 = vmatprep.subr.mxu0 0.0
        %1660 = vmatpush1.xpose.msra.mxu0 0.0
        %1661 = vmatprep.subr.mxu0 0.0
        %1662 = vmatpush1.xpose.msra.mxu0 0.0
        %1663 = vmatprep.subr.mxu0 0.0
        %1664 = vmatpush1.xpose.msra.mxu0 0.0
        %1665 = vmatprep.mubr.f32.mxu0 0.0
        %1666 = vmatmul.mubr.f32.gmra.mrb[0].mxu0 %v1596
        %v1667 = vpop.f32.mrb[0].mxu0
        %v1668 = vadd.f32 0.0, %v1667
        %v1669 = vpop.f32.mrb[0].mxu0
        %1670 = vdwg.mxu0
        %v1671 = vrcp.pop %v1229
        %v1672 = vrcp.pop %v1232
        %v1673 = vrcp.pop %v1235
        %v1674 = vrcp.pop %v1238
        %v1679 = vlaneseq
        %v1680 = vand.u32 %v1679, 127
        %v1681 = vlaneseq
        %v1682 = vshrl.u32 %v1681, 7
        %v1683 = vsub.s32 %v1680, %v1682
        %v1684 = vrot.slane %v1671, %v1683
        %v1685 = vlaneseq
        %v1686 = vshrl.u32 %v1685, 7
        %v1687 = vsub.s32 %v1680, %v1686
        %v1688 = vrot.slane %v1672, %v1687
        %v1689 = vlaneseq
        %v1690 = vshrl.u32 %v1689, 7
        %v1691 = vsub.s32 %v1680, %v1690
        %v1692 = vrot.slane %v1673, %v1691
        %v1693 = vlaneseq
        %v1694 = vshrl.u32 %v1693, 7
        %v1695 = vsub.s32 %v1680, %v1694
        %v1696 = vrot.slane %v1674, %v1695
        %vm1697 = vcmask 1042434
        %v1698 = vsel %vm1697, %v1684, %v1684
        %vm1699 = vcmask 1043459
        %v1700 = vsel %vm1699, %v1684, %v1698
        %vm1701 = vcmask 1044484
        %v1702 = vsel %vm1701, %v1684, %v1700
        %vm1703 = vcmask 1045509
        %v1704 = vsel %vm1703, %v1684, %v1702
        %vm1705 = vcmask 1046534
        %v1706 = vsel %vm1705, %v1684, %v1704
        %vm1707 = vcmask 1047559
        %v1708 = vsel %vm1707, %v1684, %v1706
        %v1709 = vsel %vm1697, %v1688, %v1688
        %v1710 = vsel %vm1699, %v1688, %v1709
        %v1711 = vsel %vm1701, %v1688, %v1710
        %v1712 = vsel %vm1703, %v1688, %v1711
        %v1713 = vsel %vm1705, %v1688, %v1712
        %v1714 = vsel %vm1707, %v1688, %v1713
        %v1715 = vsel %vm1697, %v1692, %v1692
        %v1716 = vsel %vm1699, %v1692, %v1715
        %v1717 = vsel %vm1701, %v1692, %v1716
        %v1718 = vsel %vm1703, %v1692, %v1717
        %v1719 = vsel %vm1705, %v1692, %v1718
        %v1720 = vsel %vm1707, %v1692, %v1719
        %v1721 = vsel %vm1697, %v1696, %v1696
        %v1722 = vsel %vm1699, %v1696, %v1721
        %v1723 = vsel %vm1701, %v1696, %v1722
        %v1724 = vsel %vm1703, %v1696, %v1723
        %v1725 = vsel %vm1705, %v1696, %v1724
        %v1726 = vsel %vm1707, %v1696, %v1725
        %v1731 = vmul.f32 %v1344, %v1708
        %v1732 = vmul.f32 %v1452, %v1714
        %v1733 = vmul.f32 %v1560, %v1720
        %v1734 = vmul.f32 %v1668, %v1726
        %1735 = vst.msk [vmem:[%s320] sm:$0xff] %vm894, %v1731
        %1736 = vst.msk [vmem:[%s320 + $0x8] sm:$0xff] %vm894, %v1732
        %1737 = vst.msk [vmem:[%s320 + $0x10] sm:$0xff] %vm894, %v1733
        %1738 = vst.msk [vmem:[%s320 + $0x18] sm:$0xff] %vm894, %v1734
        %s1739 = sand.u32 %s146, 1
        %s1740 = scalar_lea.sflag [#allocation7], %s1739
        %s1741 = sand.u32 %s146, 1
        %s1742 = smul.addr %s1741, 32
        %s1743 = scalar_lea.vmem [#allocation13], %s1742
        %s1744 = sand.u32 %s174, 1
        %s1745 = scalar_lea.sflag [#allocation15], %s1744
        %s1746 = sand.u32 %s174, 1
        %s1747 = smul.addr %s1746, 32
        %s1748 = scalar_lea.vmem [#allocation14], %s1747
        // Predicated region
        $region57: #{tpu_custom_call.1} parent=35 // pred_check
          %p1749 = pneg %p156
        $region58: #{tpu_custom_call.1} parent=35 // pred_check_branch
          %1751 = sbr.rel (%p1749) target = $region60
        $region59: #{tpu_custom_call.1} parent=35 // pred_region
          %s1753 = ssub.s32 512, 512
          %1754 = vsyncadd %s1740, %s1753
          %s1755 = smul.addr %s34, 4
          %s1756 = sadd.s32 %s35, %s1755
          %s1757 = smul.addr %s1756, 128
          %s1758 = scalar_lea.hbm %s4, %s1757
          %s1759 = sshll.u32 %s1743, 4
          %s1760 = int_to_ptr.vmem [resolvable:$true] %s1759
          %1765 = dma.vmem_to_hbm [thread:$0]  %s1760, 512, %s1758, %s1740, 128, 128, 8
        $region60: #{tpu_custom_call.1} parent=35 // pred_fallthru
          _
        // Predicated region
        $region61: #{tpu_custom_call.1} parent=35 // pred_check
          %p1766 = pneg %p184
        $region62: #{tpu_custom_call.1} parent=35 // pred_check_branch
          %1768 = sbr.rel (%p1766) target = $region64
        $region63: #{tpu_custom_call.1} parent=35 // pred_region
          %s1770 = ssub.s32 512, 512
          %1771 = vsyncadd %s1745, %s1770
          %s1772 = smul.addr %s34, 4
          %s1773 = sadd.s32 %s35, %s1772
          %s1774 = smul.addr %s1773, 128
          %s1775 = scalar_lea.hbm %s5, %s1774
          %s1776 = sshll.u32 %s1748, 4
          %s1777 = int_to_ptr.vmem [resolvable:$true] %s1776
          %1782 = dma.vmem_to_hbm [thread:$0]  %s1777, 512, %s1775, %s1745, 128, 128, 8
        $region64: #{tpu_custom_call.1} parent=35 // pred_fallthru
          _
      $region36: #{tpu_custom_call.1} parent=5 // pred_fallthru
        _
      %p1783 = scmp.le.s32.totalorder 2, %s25
      // Predicated region
      $region65: #{tpu_custom_call.1} parent=5 // pred_check
        %p1784 = pneg %p1783
      $region66: #{tpu_custom_call.1} parent=5 // pred_check_branch
        %1786 = sbr.rel (%p1784) target = $region68
      $region67: #{tpu_custom_call.1} parent=5 // pred_region
        %s1787 = ssub.s32 %s25, 2
        // Predicated region
        $region69: #{tpu_custom_call.1} parent=67 // pred_check
          %p1788 = pneg %p162
        $region70: #{tpu_custom_call.1} parent=67 // pred_check_branch
          %1790 = sbr.rel (%p1788) target = $region72
        $region71: #{tpu_custom_call.1} parent=67 // pred_region
          %s1791 = sand.u32 %s147, 1
          %s1792 = scalar_lea.sflag [#allocation7], %s1791
          %s1793 = sand.u32 %s147, 1
          %s1794 = smul.addr %s1793, 32
          %s1795 = scalar_lea.vmem [#allocation13], %s1794
          %1796 = dma.done %s1792, 512
        $region72: #{tpu_custom_call.1} parent=67 // pred_fallthru
          _
        // Predicated region
        $region73: #{tpu_custom_call.1} parent=67 // pred_check
          %p1797 = pneg %p190
        $region74: #{tpu_custom_call.1} parent=67 // pred_check_branch
          %1799 = sbr.rel (%p1797) target = $region76
        $region75: #{tpu_custom_call.1} parent=67 // pred_region
          %s1800 = sand.u32 %s175, 1
          %s1801 = scalar_lea.sflag [#allocation15], %s1800
          %s1802 = sand.u32 %s175, 1
          %s1803 = smul.addr %s1802, 32
          %s1804 = scalar_lea.vmem [#allocation14], %s1803
          %1805 = dma.done %s1801, 512
        $region76: #{tpu_custom_call.1} parent=67 // pred_fallthru
          _
      $region68: #{tpu_custom_call.1} parent=5 // pred_fallthru
        _
    $region6: #{tpu_custom_call.1} parent=1 // loop_footer
      %s29 = sadd.s32 1, %s25
    $region7: #{tpu_custom_call.1} parent=1 // loop_footer_branch
      %24 = sbr.rel target = $region3
    $region8: #{tpu_custom_call.1} parent=1 // loop_exit
      _
    %1806 = vsyncpa [#allocation6], 1
    %s1807 = scalar_lea.sflag [#allocation6], 1
    %1808 = vsyncpa %s1807, 1
    %1809 = vsyncpa [#allocation9], 1
    %1810 = vsyncpa [#allocation12], 1
    %s1811 = scalar_lea.sflag [#allocation12], 1
    %1812 = vsyncpa %s1811, 1
    %1813 = vsyncpa [#allocation7], 1
    %s1814 = scalar_lea.sflag [#allocation7], 1
    %1815 = vsyncpa %s1814, 1
    %1816 = vsyncpa [#allocation15], 1
    %s1817 = scalar_lea.sflag [#allocation15], 1
    %1818 = vsyncpa %s1817, 1

</llo_original>
